<compile_context>
chip_gen: v7x
topology: tpu7x:2x2x1
jax: 0.10.0
libtpu: 0.0.40
codegen_flags: <defaults>
</compile_context>

<pallas_src>
import functools

import jax
import jax.numpy as jnp
from jax.experimental import pallas as pl
from jax.experimental.pallas import tpu as pltpu

D_MODEL = 32
D_STATE = 16          # x_proj / A_log outputs are dead code in the reference forward
D_CONV = 4
EXPAND = 2
D_INNER = EXPAND * D_MODEL   # 64
EPS = 1e-5


def mamba_block_kernel(x_ref, w_in_x_ref, b_in_x_ref, w_in_res_ref,
                       b_in_res_ref, conv_w_ref, conv_b_ref, w_dt_ref,
                       b_dt_ref, d_ref, w_out_ref, b_out_ref, gamma_ref,
                       beta_ref, o_ref, *, seq_len):
    """One grid step: a (rows, d_model) slab holding rows // seq_len whole sequences."""
    rows = x_ref.shape[0]
    L = seq_len
    x = x_ref[...]                                          # (rows, d_model) f32
    mm_dtype = w_in_x_ref.dtype                             # bf16 on the fast-matmul path

    # ---- row position inside its packed sequence + hoisted shift masks ----
    row_ids = jax.lax.broadcasted_iota(jnp.int32, (rows, D_INNER), 0)
    if L & (L - 1) == 0:
        pos = jnp.bitwise_and(row_ids, L - 1)               # L is a power of two
    else:
        pos = row_ids % L

    conv_shifts = list(range(1, D_CONV))
    scan_shifts = []
    off = 1
    while off < L:                                          # ceil(log2(L)) offsets
        scan_shifts.append(off)
        off *= 2
    # Hoisted boolean masks: one compare per distinct shift for the whole body.
    masks = {s: pos < s for s in sorted(set(conv_shifts + scan_shifts + [1]))}

    def shift_down(v, s, fill):
        # v[i] <- v[i - s] within each packed sequence; the first s rows of
        # every sequence get `fill`.  pltpu.roll goes through the XLU (idle
        # here) instead of materialising shifted copies via vector stores.
        # TODO(synk): verify in the Mosaic bundle dump that axis-0 roll stays
        # on the XLU (sublane rotate), not a VMEM store+shifted-load; if it
        # degrades, re-express as pl.ds-offset reads from a VMEM scratch.
        return jnp.where(masks[s], fill, pltpu.roll(v, s, 0))

    def _silu(v):
        # x * sigmoid(x) with an approx EUP reciprocal (single-slot EUP is the
        # likely binding unit at d_inner=64; VPU lanes are half idle anyway).
        return v * pl.reciprocal(1.0 + jnp.exp(-v), approx=True)

    def mm(a, w_ref, b_ref):
        w = w_ref[...]
        if a.dtype != w.dtype:                              # activation -> MXU dtype
            a = a.astype(w.dtype)
        return jnp.dot(a, w, preferred_element_type=jnp.float32) + b_ref[...]

    # ---- in_proj, split into two lane-aligned matmuls (no 128->64 lane slice) ----
    # Cast x for the MXU once (feeds both matmuls); residual add stays f32.
    x_mm = x.astype(mm_dtype) if mm_dtype != x.dtype else x
    xi = _silu(mm(x_mm, w_in_x_ref, b_in_x_ref))            # (rows, d_inner)
    res = mm(x_mm, w_in_res_ref, b_in_res_ref)              # (rows, d_inner)

    # ---- causal depthwise conv1d (padding=d_conv-1, trimmed), roll + mask ----
    acc = xi * conv_w_ref[D_CONV - 1:D_CONV, :]
    for s in conv_shifts:
        acc = acc + shift_down(xi, s, 0.0) * conv_w_ref[D_CONV - 1 - s:D_CONV - s, :]
    xc = _silu(acc + conv_b_ref[...])                       # (rows, d_inner)

    # ---- alpha = sigmoid(softplus(dt_proj(xc))) fused, overflow-safe ----
    # sigmoid(softplus(z)) == 1 - 1/(2 + exp(z));  exp(z)->inf gives alpha=1.
    z = mm(xc, w_dt_ref, b_dt_ref)
    alpha = 1.0 - pl.reciprocal(2.0 + jnp.exp(z), approx=True)

    # ---- selective scan: y_t = alpha_t*xc_t + (1-alpha_t)*y_{t-1}, y_0 = xc_0 ----
    # First-order linear recurrence solved with a log-depth Hillis-Steele scan
    # on the pair (a, b); combine: (a1,b1) then (a2,b2) -> (a1*a2, a2*b1 + b2).
    # Per-sequence masking inside shift_down keeps packed sequences independent.
    # TODO(synk): x_proj (B, C) and A = -exp(A_log) are computed but unused in
    # the reference _selective_scan, so they are omitted (no effect on output).
    is_first = masks[1]                                     # pos == 0
    a = jnp.where(is_first, 0.0, 1.0 - alpha)
    b = jnp.where(is_first, xc, alpha * xc)
    for s in scan_shifts:
        a_sh = shift_down(a, s, 1.0)
        b_sh = shift_down(b, s, 0.0)
        b = a * b_sh + b
        a = a * a_sh
    y = b + xc * d_ref[...]                                 # + x * D

    # ---- gate with silu(res), out_proj, residual, LayerNorm(d_model) ----
    y = y * _silu(res)
    out = mm(y, w_out_ref, b_out_ref) + x
    mean = jnp.mean(out, axis=-1, keepdims=True)
    cent = out - mean
    var = jnp.mean(cent * cent, axis=-1, keepdims=True)
    o_ref[...] = cent * jax.lax.rsqrt(var + EPS) * gamma_ref[...] + beta_ref[...]
    # TODO(synk): d_model=32 < 128 lanes -> final store is a masked vst; packing
    # 4 row-groups into the 128-lane axis (block-diagonal out_proj, grouped
    # LayerNorm) is the remaining structural lever, left as a follow-up.


def _choose_batch_tile(batch, seq_len, target_rows=4096):
    """Number of whole sequences packed per grid step.

    Must divide `batch` so every block is full; rows per block must be
    sublane (8) aligned and <= target_rows (4096 rows of ~10 live f32
    (rows, 64) intermediates stays well under v7x's 64 MiB VMEM).  Prefer the
    largest candidate that yields an even grid so both v7x TensorCores get
    work, unless that would shrink the tile below half of the best candidate
    (tile size still dominates on single-TC v5e/v6e).
    """
    candidates = [bt for bt in range(1, batch + 1)
                  if batch % bt == 0 and (bt * seq_len) % 8 == 0
                  and bt * seq_len <= target_rows]
    if not candidates:
        return batch            # a single full-array block is always legal
    best = max(candidates)
    even = [bt for bt in candidates if (batch // bt) % 2 == 0]
    if even and max(even) * 2 >= best:
        return max(even)
    return best


def mamba_block_forward(x, p, *, use_bf16_matmul=False,
                        target_rows=4096,
                        vmem_limit_bytes=48 * 1024 * 1024):
    """target_rows/vmem_limit defaults are v7x-safe; v5e/v6e can use 8192 / 64 MiB."""
    B, L, d_model = x.shape
    assert d_model == D_MODEL
    bt = _choose_batch_tile(B, L, target_rows=target_rows)
    rows = bt * L
    n_blocks = B // bt
    x2 = x.reshape(B * L, d_model)   # collapse (B, L) -> row axis, lanes = features

    if use_bf16_matmul:
        # Pre-cast MXU weights once in the wrapper: halves weight DMA and
        # removes per-step VPU converts.  Biases / scan / LayerNorm stay f32.
        w_in_x = p["w_in_x"].astype(jnp.bfloat16)
        w_in_res = p["w_in_res"].astype(jnp.bfloat16)
        w_dt = p["w_dt"].astype(jnp.bfloat16)
        w_out = p["w_out"].astype(jnp.bfloat16)
    else:
        w_in_x, w_in_res, w_dt, w_out = p["w_in_x"], p["w_in_res"], p["w_dt"], p["w_out"]

    kernel = functools.partial(mamba_block_kernel, seq_len=L)

    def wspec(shape):
        # Constant index_map: the resident block is reused across grid steps.
        # TODO(synk): pipeline_mode=pl.Buffered(1) would drop the second buffer
        # for these constants, but all weights total <100 KB so the headroom is
        # negligible; skipped to keep the pipeline config conservative.
        return pl.BlockSpec(shape, lambda i: (0, 0))

    in_specs = [
        pl.BlockSpec((rows, d_model), lambda i: (i, 0)),    # x rows
        wspec((d_model, D_INNER)),                          # w_in_x
        wspec((1, D_INNER)),                                # b_in_x
        wspec((d_model, D_INNER)),                          # w_in_res
        wspec((1, D_INNER)),                                # b_in_res
        wspec((D_CONV, D_INNER)),                           # conv_w
        wspec((1, D_INNER)),                                # conv_b
        wspec((D_INNER, D_INNER)),                          # w_dt
        wspec((1, D_INNER)),                                # b_dt
        wspec((1, D_INNER)),                                # D
        wspec((D_INNER, d_model)),                          # w_out
        wspec((1, d_model)),                                # b_out
        wspec((1, d_model)),                                # gamma
        wspec((1, d_model)),                                # beta
    ]
    out_specs = pl.BlockSpec((rows, d_model), lambda i: (i, 0))

    out2 = pl.pallas_call(
        kernel,
        out_shape=jax.ShapeDtypeStruct((B * L, d_model), jnp.float32),
        grid_spec=pltpu.PrefetchScalarGridSpec(
            num_scalar_prefetch=0,
            grid=(n_blocks,),
            in_specs=in_specs,
            out_specs=out_specs),
        compiler_params=pltpu.CompilerParams(
            dimension_semantics=("parallel",),
            vmem_limit_bytes=vmem_limit_bytes),
    )(x2, w_in_x, p["b_in_x"], w_in_res, p["b_in_res"], p["conv_w"],
      p["conv_b"], w_dt, p["b_dt"], p["D"], w_out, p["b_out"],
      p["gamma"], p["beta"])
    return out2.reshape(B, L, d_model)


def init_params(key):
    ks = jax.random.split(key, 5)
    return {
        "w_in_x":   0.02 * jax.random.normal(ks[0], (D_MODEL, D_INNER), jnp.float32),
        "b_in_x":   0.01 * jnp.ones((1, D_INNER), jnp.float32),
        "w_in_res": 0.02 * jax.random.normal(ks[1], (D_MODEL, D_INNER), jnp.float32),
        "b_in_res": 0.01 * jnp.ones((1, D_INNER), jnp.float32),
        "conv_w":   0.10 * jax.random.normal(ks[2], (D_CONV, D_INNER), jnp.float32),
        "conv_b":   0.01 * jnp.ones((1, D_INNER), jnp.float32),
        "w_dt":     0.02 * jax.random.normal(ks[3], (D_INNER, D_INNER), jnp.float32),
        "b_dt":     jnp.zeros((1, D_INNER), jnp.float32),
        "D":        jnp.ones((1, D_INNER), jnp.float32),
        "w_out":    0.02 * jax.random.normal(ks[4], (D_INNER, D_MODEL), jnp.float32),
        "b_out":    jnp.zeros((1, D_MODEL), jnp.float32),
        "gamma":    jnp.ones((1, D_MODEL), jnp.float32),
        "beta":     jnp.zeros((1, D_MODEL), jnp.float32),
    }


def reference_forward(x, p):
    """Pure-JAX mirror of the PyTorch forward for correctness checking."""
    B, L, _ = x.shape
    residual = x
    xi = x @ p["w_in_x"] + p["b_in_x"][0]
    res = x @ p["w_in_res"] + p["b_in_res"][0]
    xi = xi * jax.nn.sigmoid(xi)
    xp = jnp.pad(xi, ((0, 0), (D_CONV - 1, 0), (0, 0)))
    xc = jnp.zeros_like(xi)
    for k in range(D_CONV):
        xc = xc + xp[:, k:k + L, :] * p["conv_w"][k][None, None, :]
    xc = xc + p["conv_b"][0]
    xc = xc * jax.nn.sigmoid(xc)
    dt = jax.nn.softplus(xc @ p["w_dt"] + p["b_dt"][0])
    alpha = jax.nn.sigmoid(dt)
    ys = [xc[:, 0]]
    for i in range(1, L):
        ys.append(alpha[:, i] * xc[:, i] + (1.0 - alpha[:, i]) * ys[-1])
    y = jnp.stack(ys, axis=1)
    y = y + xc * p["D"][0]
    y = y * (res * jax.nn.sigmoid(res))
    out = y @ p["w_out"] + p["b_out"][0] + residual
    mean = out.mean(-1, keepdims=True)
    var = ((out - mean) ** 2).mean(-1, keepdims=True)
    return (out - mean) / jnp.sqrt(var + EPS) * p["gamma"][0] + p["beta"][0]


if __name__ == "__main__":
    key = jax.random.PRNGKey(0)
    kx, kp, kx2 = jax.random.split(key, 3)
    params = init_params(kp)

    # Test 1: power-of-two L; _choose_batch_tile picks bt=1 -> grid=(2,) so
    # both v7x TensorCores would get one block each.
    batch, seq_len = 2, 8
    x = jax.random.normal(kx, (batch, seq_len, D_MODEL), jnp.float32)
    ref = reference_forward(x, params)

    out = jax.block_until_ready(mamba_block_forward(x, params))
    assert out.shape == (batch, seq_len, D_MODEL)
    err = float(jnp.max(jnp.abs(out - ref)))
    assert err < 5e-3, err        # approx-EUP reciprocals in silu / alpha

    # bf16 MXU-input path (weights pre-cast in wrapper); scan/LayerNorm stay f32.
    # TODO(synk): re-validate the bf16 tolerance at production seq_len before
    # enabling it by default -- matmul error compounds through the recurrence.
    out_bf16 = jax.block_until_ready(
        mamba_block_forward(x, params, use_bf16_matmul=True))
    err_bf16 = float(jnp.max(jnp.abs(out_bf16 - ref)))
    assert err_bf16 < 3e-2, err_bf16

    # Test 2: non-power-of-two L with several sequences packed per block
    # (exercises the `pos = row % L` path and the roll+mask segmentation).
    batch2, seq_len2 = 4, 6
    x2 = jax.random.normal(kx2, (batch2, seq_len2, D_MODEL), jnp.float32)
    ref2 = reference_forward(x2, params)
    out2 = jax.block_until_ready(mamba_block_forward(x2, params))
    err2 = float(jnp.max(jnp.abs(out2 - ref2)))
    assert err2 < 5e-3, err2

    print("KERNEL_OK")
</pallas_src>

<mosaic_0001>
module attributes {stable_mosaic.version = 11 : i64} {
  func.func @mamba_block_kernel(%arg0: i32, %arg1: memref<8x32xf32, #tpu.memory_space<vmem>>, %arg2: memref<32x64xf32, #tpu.memory_space<vmem>>, %arg3: memref<1x64xf32, #tpu.memory_space<vmem>>, %arg4: memref<32x64xf32, #tpu.memory_space<vmem>>, %arg5: memref<1x64xf32, #tpu.memory_space<vmem>>, %arg6: memref<4x64xf32, #tpu.memory_space<vmem>>, %arg7: memref<1x64xf32, #tpu.memory_space<vmem>>, %arg8: memref<64x64xf32, #tpu.memory_space<vmem>>, %arg9: memref<1x64xf32, #tpu.memory_space<vmem>>, %arg10: memref<1x64xf32, #tpu.memory_space<vmem>>, %arg11: memref<64x32xf32, #tpu.memory_space<vmem>>, %arg12: memref<1x32xf32, #tpu.memory_space<vmem>>, %arg13: memref<1x32xf32, #tpu.memory_space<vmem>>, %arg14: memref<1x32xf32, #tpu.memory_space<vmem>>, %arg15: memref<8x32xf32, #tpu.memory_space<vmem>>) attributes {dimension_semantics = [#tpu.dimension_semantics<parallel>], iteration_bounds = array<i64: 2>, scalar_prefetch = 0 : i64, scratch_operands = 0 : i64, tpu.core_type = #tpu.core_type<tc>, window_params = [{transform_indices = @transform_0, window_bounds = array<i64: 8, 32>}, {pipeline_mode = #tpu.pipeline_mode<synchronous>, transform_indices = @transform_1, window_bounds = array<i64: 32, 64>}, {pipeline_mode = #tpu.pipeline_mode<synchronous>, transform_indices = @transform_2, window_bounds = array<i64: 1, 64>}, {pipeline_mode = #tpu.pipeline_mode<synchronous>, transform_indices = @transform_3, window_bounds = array<i64: 32, 64>}, {pipeline_mode = #tpu.pipeline_mode<synchronous>, transform_indices = @transform_4, window_bounds = array<i64: 1, 64>}, {pipeline_mode = #tpu.pipeline_mode<synchronous>, transform_indices = @transform_5, window_bounds = array<i64: 4, 64>}, {pipeline_mode = #tpu.pipeline_mode<synchronous>, transform_indices = @transform_6, window_bounds = array<i64: 1, 64>}, {pipeline_mode = #tpu.pipeline_mode<synchronous>, transform_indices = @transform_7, window_bounds = array<i64: 64, 64>}, {pipeline_mode = #tpu.pipeline_mode<synchronous>, transform_indices = @transform_8, window_bounds = array<i64: 1, 64>}, {pipeline_mode = #tpu.pipeline_mode<synchronous>, transform_indices = @transform_9, window_bounds = array<i64: 1, 64>}, {pipeline_mode = #tpu.pipeline_mode<synchronous>, transform_indices = @transform_10, window_bounds = array<i64: 64, 32>}, {pipeline_mode = #tpu.pipeline_mode<synchronous>, transform_indices = @transform_11, window_bounds = array<i64: 1, 32>}, {pipeline_mode = #tpu.pipeline_mode<synchronous>, transform_indices = @transform_12, window_bounds = array<i64: 1, 32>}, {pipeline_mode = #tpu.pipeline_mode<synchronous>, transform_indices = @transform_13, window_bounds = array<i64: 1, 32>}, {transform_indices = @transform_14, window_bounds = array<i64: 8, 32>}]} {
    %c0 = arith.constant 0 : index
    %c0_0 = arith.constant 0 : index
    %0 = vector.load %arg1[%c0, %c0_0] : memref<8x32xf32, #tpu.memory_space<vmem>>, vector<8x32xf32>
    %1 = tpu.iota {dimensions = array<i32: 0>} : vector<8x64xi32>
    %c7_i32 = arith.constant 7 : i32
    %2 = vector.broadcast %c7_i32 : i32 to vector<8x64xi32>
    %3 = arith.andi %1, %2 : vector<8x64xi32>
    %c1_i32 = arith.constant 1 : i32
    %4 = vector.broadcast %c1_i32 : i32 to vector<8x64xi32>
    %5 = arith.cmpi slt, %3, %4 : vector<8x64xi32>
    %c2_i32 = arith.constant 2 : i32
    %6 = vector.broadcast %c2_i32 : i32 to vector<8x64xi32>
    %7 = arith.cmpi slt, %3, %6 : vector<8x64xi32>
    %c3_i32 = arith.constant 3 : i32
    %8 = vector.broadcast %c3_i32 : i32 to vector<8x64xi32>
    %9 = arith.cmpi slt, %3, %8 : vector<8x64xi32>
    %c4_i32 = arith.constant 4 : i32
    %10 = vector.broadcast %c4_i32 : i32 to vector<8x64xi32>
    %11 = arith.cmpi slt, %3, %10 : vector<8x64xi32>
    %c0_1 = arith.constant 0 : index
    %c0_2 = arith.constant 0 : index
    %12 = vector.load %arg2[%c0_1, %c0_2] : memref<32x64xf32, #tpu.memory_space<vmem>>, vector<32x64xf32>
    %cst = arith.constant dense<0.000000e+00> : vector<8x64xf32>
    %13 = tpu.matmul %0, %12, %cst {dimension_numbers = #tpu.dot_dimension_numbers<[1], [0], [0], [1], [0, 0, 1, 1], [], []>} : vector<8x32xf32>, vector<32x64xf32>, vector<8x64xf32> -> vector<8x64xf32>
    %c0_3 = arith.constant 0 : index
    %c0_4 = arith.constant 0 : index
    %14 = vector.load %arg3[%c0_3, %c0_4] : memref<1x64xf32, #tpu.memory_space<vmem>>, vector<1x64xf32>
    %15 = vector.broadcast %14 : vector<1x64xf32> to vector<8x64xf32>
    %16 = arith.addf %13, %15 : vector<8x64xf32>
    %cst_5 = arith.constant 0.000000e+00 : f32
    %17 = vector.broadcast %cst_5 : f32 to vector<8x64xf32>
    %18 = arith.subf %17, %16 : vector<8x64xf32>
    %19 = math.exp %18 : vector<8x64xf32>
    %cst_6 = arith.constant 1.000000e+00 : f32
    %20 = vector.broadcast %cst_6 : f32 to vector<8x64xf32>
    %21 = arith.addf %20, %19 : vector<8x64xf32>
    %22 = tpu.reciprocal %21 {approx = true} : vector<8x64xf32> -> vector<8x64xf32>
    %23 = arith.mulf %16, %22 : vector<8x64xf32>
    %c0_7 = arith.constant 0 : index
    %c0_8 = arith.constant 0 : index
    %24 = vector.load %arg4[%c0_7, %c0_8] : memref<32x64xf32, #tpu.memory_space<vmem>>, vector<32x64xf32>
    %cst_9 = arith.constant dense<0.000000e+00> : vector<8x64xf32>
    %25 = tpu.matmul %0, %24, %cst_9 {dimension_numbers = #tpu.dot_dimension_numbers<[1], [0], [0], [1], [0, 0, 1, 1], [], []>} : vector<8x32xf32>, vector<32x64xf32>, vector<8x64xf32> -> vector<8x64xf32>
    %c0_10 = arith.constant 0 : index
    %c0_11 = arith.constant 0 : index
    %26 = vector.load %arg5[%c0_10, %c0_11] : memref<1x64xf32, #tpu.memory_space<vmem>>, vector<1x64xf32>
    %27 = vector.broadcast %26 : vector<1x64xf32> to vector<8x64xf32>
    %28 = arith.addf %25, %27 : vector<8x64xf32>
    %c3 = arith.constant 3 : index
    %c0_12 = arith.constant 0 : index
    %29 = vector.load %arg6[%c3, %c0_12] : memref<4x64xf32, #tpu.memory_space<vmem>>, vector<1x64xf32>
    %30 = vector.broadcast %29 : vector<1x64xf32> to vector<8x64xf32>
    %31 = arith.mulf %23, %30 : vector<8x64xf32>
    %c1_i32_13 = arith.constant 1 : i32
    %32 = tpu.dynamic_rotate %23 by %c1_i32_13 dim 0 : vector<8x64xf32>, i32 -> vector<8x64xf32>
    %cst_14 = arith.constant 0.000000e+00 : f32
    %33 = vector.broadcast %cst_14 : f32 to vector<8x64xf32>
    %34 = arith.select %5, %33, %32 : vector<8x64xi1>, vector<8x64xf32>
    %c2 = arith.constant 2 : index
    %c0_15 = arith.constant 0 : index
    %35 = vector.load %arg6[%c2, %c0_15] : memref<4x64xf32, #tpu.memory_space<vmem>>, vector<1x64xf32>
    %36 = vector.broadcast %35 : vector<1x64xf32> to vector<8x64xf32>
    %37 = arith.mulf %34, %36 : vector<8x64xf32>
    %38 = arith.addf %31, %37 : vector<8x64xf32>
    %c2_i32_16 = arith.constant 2 : i32
    %39 = tpu.dynamic_rotate %23 by %c2_i32_16 dim 0 : vector<8x64xf32>, i32 -> vector<8x64xf32>
    %cst_17 = arith.constant 0.000000e+00 : f32
    %40 = vector.broadcast %cst_17 : f32 to vector<8x64xf32>
    %41 = arith.select %7, %40, %39 : vector<8x64xi1>, vector<8x64xf32>
    %c1 = arith.constant 1 : index
    %c0_18 = arith.constant 0 : index
    %42 = vector.load %arg6[%c1, %c0_18] : memref<4x64xf32, #tpu.memory_space<vmem>>, vector<1x64xf32>
    %43 = vector.broadcast %42 : vector<1x64xf32> to vector<8x64xf32>
    %44 = arith.mulf %41, %43 : vector<8x64xf32>
    %45 = arith.addf %38, %44 : vector<8x64xf32>
    %c3_i32_19 = arith.constant 3 : i32
    %46 = tpu.dynamic_rotate %23 by %c3_i32_19 dim 0 : vector<8x64xf32>, i32 -> vector<8x64xf32>
    %cst_20 = arith.constant 0.000000e+00 : f32
    %47 = vector.broadcast %cst_20 : f32 to vector<8x64xf32>
    %48 = arith.select %9, %47, %46 : vector<8x64xi1>, vector<8x64xf32>
    %c0_21 = arith.constant 0 : index
    %c0_22 = arith.constant 0 : index
    %49 = vector.load %arg6[%c0_21, %c0_22] : memref<4x64xf32, #tpu.memory_space<vmem>>, vector<1x64xf32>
    %50 = vector.broadcast %49 : vector<1x64xf32> to vector<8x64xf32>
    %51 = arith.mulf %48, %50 : vector<8x64xf32>
    %52 = arith.addf %45, %51 : vector<8x64xf32>
    %c0_23 = arith.constant 0 : index
    %c0_24 = arith.constant 0 : index
    %53 = vector.load %arg7[%c0_23, %c0_24] : memref<1x64xf32, #tpu.memory_space<vmem>>, vector<1x64xf32>
    %54 = vector.broadcast %53 : vector<1x64xf32> to vector<8x64xf32>
    %55 = arith.addf %52, %54 : vector<8x64xf32>
    %cst_25 = arith.constant 0.000000e+00 : f32
    %56 = vector.broadcast %cst_25 : f32 to vector<8x64xf32>
    %57 = arith.subf %56, %55 : vector<8x64xf32>
    %58 = math.exp %57 : vector<8x64xf32>
    %cst_26 = arith.constant 1.000000e+00 : f32
    %59 = vector.broadcast %cst_26 : f32 to vector<8x64xf32>
    %60 = arith.addf %59, %58 : vector<8x64xf32>
    %61 = tpu.reciprocal %60 {approx = true} : vector<8x64xf32> -> vector<8x64xf32>
    %62 = arith.mulf %55, %61 : vector<8x64xf32>
    %c0_27 = arith.constant 0 : index
    %c0_28 = arith.constant 0 : index
    %63 = vector.load %arg8[%c0_27, %c0_28] : memref<64x64xf32, #tpu.memory_space<vmem>>, vector<64x64xf32>
    %cst_29 = arith.constant dense<0.000000e+00> : vector<8x64xf32>
    %64 = tpu.matmul %62, %63, %cst_29 {dimension_numbers = #tpu.dot_dimension_numbers<[1], [0], [0], [1], [0, 0, 1, 1], [], []>} : vector<8x64xf32>, vector<64x64xf32>, vector<8x64xf32> -> vector<8x64xf32>
    %c0_30 = arith.constant 0 : index
    %c0_31 = arith.constant 0 : index
    %65 = vector.load %arg9[%c0_30, %c0_31] : memref<1x64xf32, #tpu.memory_space<vmem>>, vector<1x64xf32>
    %66 = vector.broadcast %65 : vector<1x64xf32> to vector<8x64xf32>
    %67 = arith.addf %64, %66 : vector<8x64xf32>
    %68 = math.exp %67 : vector<8x64xf32>
    %cst_32 = arith.constant 2.000000e+00 : f32
    %69 = vector.broadcast %cst_32 : f32 to vector<8x64xf32>
    %70 = arith.addf %69, %68 : vector<8x64xf32>
    %71 = tpu.reciprocal %70 {approx = true} : vector<8x64xf32> -> vector<8x64xf32>
    %cst_33 = arith.constant 1.000000e+00 : f32
    %72 = vector.broadcast %cst_33 : f32 to vector<8x64xf32>
    %73 = arith.subf %72, %71 : vector<8x64xf32>
    %cst_34 = arith.constant 1.000000e+00 : f32
    %74 = vector.broadcast %cst_34 : f32 to vector<8x64xf32>
    %75 = arith.subf %74, %73 : vector<8x64xf32>
    %cst_35 = arith.constant 0.000000e+00 : f32
    %76 = vector.broadcast %cst_35 : f32 to vector<8x64xf32>
    %77 = arith.select %5, %76, %75 : vector<8x64xi1>, vector<8x64xf32>
    %78 = arith.mulf %73, %62 : vector<8x64xf32>
    %79 = arith.select %5, %62, %78 : vector<8x64xi1>, vector<8x64xf32>
    %c1_i32_36 = arith.constant 1 : i32
    %80 = tpu.dynamic_rotate %77 by %c1_i32_36 dim 0 : vector<8x64xf32>, i32 -> vector<8x64xf32>
    %cst_37 = arith.constant 1.000000e+00 : f32
    %81 = vector.broadcast %cst_37 : f32 to vector<8x64xf32>
    %82 = arith.select %5, %81, %80 : vector<8x64xi1>, vector<8x64xf32>
    %c1_i32_38 = arith.constant 1 : i32
    %83 = tpu.dynamic_rotate %79 by %c1_i32_38 dim 0 : vector<8x64xf32>, i32 -> vector<8x64xf32>
    %cst_39 = arith.constant 0.000000e+00 : f32
    %84 = vector.broadcast %cst_39 : f32 to vector<8x64xf32>
    %85 = arith.select %5, %84, %83 : vector<8x64xi1>, vector<8x64xf32>
    %86 = arith.mulf %77, %85 : vector<8x64xf32>
    %87 = arith.addf %86, %79 : vector<8x64xf32>
    %88 = arith.mulf %77, %82 : vector<8x64xf32>
    %c2_i32_40 = arith.constant 2 : i32
    %89 = tpu.dynamic_rotate %88 by %c2_i32_40 dim 0 : vector<8x64xf32>, i32 -> vector<8x64xf32>
    %cst_41 = arith.constant 1.000000e+00 : f32
    %90 = vector.broadcast %cst_41 : f32 to vector<8x64xf32>
    %91 = arith.select %7, %90, %89 : vector<8x64xi1>, vector<8x64xf32>
    %c2_i32_42 = arith.constant 2 : i32
    %92 = tpu.dynamic_rotate %87 by %c2_i32_42 dim 0 : vector<8x64xf32>, i32 -> vector<8x64xf32>
    %cst_43 = arith.constant 0.000000e+00 : f32
    %93 = vector.broadcast %cst_43 : f32 to vector<8x64xf32>
    %94 = arith.select %7, %93, %92 : vector<8x64xi1>, vector<8x64xf32>
    %95 = arith.mulf %88, %94 : vector<8x64xf32>
    %96 = arith.addf %95, %87 : vector<8x64xf32>
    %97 = arith.mulf %88, %91 : vector<8x64xf32>
    %c4_i32_44 = arith.constant 4 : i32
    %98 = tpu.dynamic_rotate %96 by %c4_i32_44 dim 0 : vector<8x64xf32>, i32 -> vector<8x64xf32>
    %cst_45 = arith.constant 0.000000e+00 : f32
    %99 = vector.broadcast %cst_45 : f32 to vector<8x64xf32>
    %100 = arith.select %11, %99, %98 : vector<8x64xi1>, vector<8x64xf32>
    %101 = arith.mulf %97, %100 : vector<8x64xf32>
    %102 = arith.addf %101, %96 : vector<8x64xf32>
    %c0_46 = arith.constant 0 : index
    %c0_47 = arith.constant 0 : index
    %103 = vector.load %arg10[%c0_46, %c0_47] : memref<1x64xf32, #tpu.memory_space<vmem>>, vector<1x64xf32>
    %104 = vector.broadcast %103 : vector<1x64xf32> to vector<8x64xf32>
    %105 = arith.mulf %62, %104 : vector<8x64xf32>
    %106 = arith.addf %102, %105 : vector<8x64xf32>
    %cst_48 = arith.constant 0.000000e+00 : f32
    %107 = vector.broadcast %cst_48 : f32 to vector<8x64xf32>
    %108 = arith.subf %107, %28 : vector<8x64xf32>
    %109 = math.exp %108 : vector<8x64xf32>
    %cst_49 = arith.constant 1.000000e+00 : f32
    %110 = vector.broadcast %cst_49 : f32 to vector<8x64xf32>
    %111 = arith.addf %110, %109 : vector<8x64xf32>
    %112 = tpu.reciprocal %111 {approx = true} : vector<8x64xf32> -> vector<8x64xf32>
    %113 = arith.mulf %28, %112 : vector<8x64xf32>
    %114 = arith.mulf %106, %113 : vector<8x64xf32>
    %c0_50 = arith.constant 0 : index
    %c0_51 = arith.constant 0 : index
    %115 = vector.load %arg11[%c0_50, %c0_51] : memref<64x32xf32, #tpu.memory_space<vmem>>, vector<64x32xf32>
    %cst_52 = arith.constant dense<0.000000e+00> : vector<8x32xf32>
    %116 = tpu.matmul %114, %115, %cst_52 {dimension_numbers = #tpu.dot_dimension_numbers<[1], [0], [0], [1], [0, 0, 1, 1], [], []>} : vector<8x64xf32>, vector<64x32xf32>, vector<8x32xf32> -> vector<8x32xf32>
    %c0_53 = arith.constant 0 : index
    %c0_54 = arith.constant 0 : index
    %117 = vector.load %arg12[%c0_53, %c0_54] : memref<1x32xf32, #tpu.memory_space<vmem>>, vector<1x32xf32>
    %118 = vector.broadcast %117 : vector<1x32xf32> to vector<8x32xf32>
    %119 = arith.addf %116, %118 : vector<8x32xf32>
    %120 = arith.addf %119, %0 : vector<8x32xf32>
    %cst_55 = arith.constant dense<0.000000e+00> : vector<8xf32>
    %121 = vector.multi_reduction <add>, %120, %cst_55 [1] : vector<8x32xf32> to vector<8xf32>
    %122 = vector.shape_cast %121 : vector<8xf32> to vector<8x1xf32>
    %cst_56 = arith.constant 3.200000e+01 : f32
    %123 = vector.broadcast %cst_56 : f32 to vector<8x1xf32>
    %124 = arith.divf %122, %123 : vector<8x1xf32>
    %125 = vector.broadcast %124 : vector<8x1xf32> to vector<8x32xf32>
    %126 = arith.subf %120, %125 : vector<8x32xf32>
    %127 = arith.mulf %126, %126 : vector<8x32xf32>
    %cst_57 = arith.constant dense<0.000000e+00> : vector<8xf32>
    %128 = vector.multi_reduction <add>, %127, %cst_57 [1] : vector<8x32xf32> to vector<8xf32>
    %129 = vector.shape_cast %128 : vector<8xf32> to vector<8x1xf32>
    %cst_58 = arith.constant 3.200000e+01 : f32
    %130 = vector.broadcast %cst_58 : f32 to vector<8x1xf32>
    %131 = arith.divf %129, %130 : vector<8x1xf32>
    %cst_59 = arith.constant 9.99999974E-6 : f32
    %132 = vector.broadcast %cst_59 : f32 to vector<8x1xf32>
    %133 = arith.addf %131, %132 : vector<8x1xf32>
    %134 = math.rsqrt %133 : vector<8x1xf32>
    %135 = vector.broadcast %134 : vector<8x1xf32> to vector<8x32xf32>
    %136 = arith.mulf %126, %135 : vector<8x32xf32>
    %c0_60 = arith.constant 0 : index
    %c0_61 = arith.constant 0 : index
    %137 = vector.load %arg13[%c0_60, %c0_61] : memref<1x32xf32, #tpu.memory_space<vmem>>, vector<1x32xf32>
    %138 = vector.broadcast %137 : vector<1x32xf32> to vector<8x32xf32>
    %139 = arith.mulf %136, %138 : vector<8x32xf32>
    %c0_62 = arith.constant 0 : index
    %c0_63 = arith.constant 0 : index
    %140 = vector.load %arg14[%c0_62, %c0_63] : memref<1x32xf32, #tpu.memory_space<vmem>>, vector<1x32xf32>
    %141 = vector.broadcast %140 : vector<1x32xf32> to vector<8x32xf32>
    %142 = arith.addf %139, %141 : vector<8x32xf32>
    %c0_64 = arith.constant 0 : index
    %c0_65 = arith.constant 0 : index
    %143 = vector.load %arg15[%c0_64, %c0_65] : memref<8x32xf32, #tpu.memory_space<vmem>>, vector<8x32xf32>
    tpu.vector_store %arg15[%c0_64, %c0_65], %142 {strides = array<i32>} : memref<8x32xf32, #tpu.memory_space<vmem>>, vector<8x32xf32>,
    return
  }
  func.func @transform_0(%arg0: i32) -> (i32, i32) {
    %c0_i32 = arith.constant 0 : i32
    %c0_i32_0 = arith.constant 0 : i32
    return %arg0, %c0_i32 : i32, i32
  }
  func.func @transform_1(%arg0: i32) -> (i32, i32) {
    %c0_i32 = arith.constant 0 : i32
    %c0_i32_0 = arith.constant 0 : i32
    %c0_i32_1 = arith.constant 0 : i32
    return %c0_i32, %c0_i32_0 : i32, i32
  }
  func.func @transform_2(%arg0: i32) -> (i32, i32) {
    %c0_i32 = arith.constant 0 : i32
    %c0_i32_0 = arith.constant 0 : i32
    %c0_i32_1 = arith.constant 0 : i32
    return %c0_i32, %c0_i32_0 : i32, i32
  }
  func.func @transform_3(%arg0: i32) -> (i32, i32) {
    %c0_i32 = arith.constant 0 : i32
    %c0_i32_0 = arith.constant 0 : i32
    %c0_i32_1 = arith.constant 0 : i32
    return %c0_i32, %c0_i32_0 : i32, i32
  }
  func.func @transform_4(%arg0: i32) -> (i32, i32) {
    %c0_i32 = arith.constant 0 : i32
    %c0_i32_0 = arith.constant 0 : i32
    %c0_i32_1 = arith.constant 0 : i32
    return %c0_i32, %c0_i32_0 : i32, i32
  }
  func.func @transform_5(%arg0: i32) -> (i32, i32) {
    %c0_i32 = arith.constant 0 : i32
    %c0_i32_0 = arith.constant 0 : i32
    %c0_i32_1 = arith.constant 0 : i32
    return %c0_i32, %c0_i32_0 : i32, i32
  }
  func.func @transform_6(%arg0: i32) -> (i32, i32) {
    %c0_i32 = arith.constant 0 : i32
    %c0_i32_0 = arith.constant 0 : i32
    %c0_i32_1 = arith.constant 0 : i32
    return %c0_i32, %c0_i32_0 : i32, i32
  }
  func.func @transform_7(%arg0: i32) -> (i32, i32) {
    %c0_i32 = arith.constant 0 : i32
    %c0_i32_0 = arith.constant 0 : i32
    %c0_i32_1 = arith.constant 0 : i32
    return %c0_i32, %c0_i32_0 : i32, i32
  }
  func.func @transform_8(%arg0: i32) -> (i32, i32) {
    %c0_i32 = arith.constant 0 : i32
    %c0_i32_0 = arith.constant 0 : i32
    %c0_i32_1 = arith.constant 0 : i32
    return %c0_i32, %c0_i32_0 : i32, i32
  }
  func.func @transform_9(%arg0: i32) -> (i32, i32) {
    %c0_i32 = arith.constant 0 : i32
    %c0_i32_0 = arith.constant 0 : i32
    %c0_i32_1 = arith.constant 0 : i32
    return %c0_i32, %c0_i32_0 : i32, i32
  }
  func.func @transform_10(%arg0: i32) -> (i32, i32) {
    %c0_i32 = arith.constant 0 : i32
    %c0_i32_0 = arith.constant 0 : i32
    %c0_i32_1 = arith.constant 0 : i32
    return %c0_i32, %c0_i32_0 : i32, i32
  }
  func.func @transform_11(%arg0: i32) -> (i32, i32) {
    %c0_i32 = arith.constant 0 : i32
    %c0_i32_0 = arith.constant 0 : i32
    %c0_i32_1 = arith.constant 0 : i32
    return %c0_i32, %c0_i32_0 : i32, i32
  }
  func.func @transform_12(%arg0: i32) -> (i32, i32) {
    %c0_i32 = arith.constant 0 : i32
    %c0_i32_0 = arith.constant 0 : i32
    %c0_i32_1 = arith.constant 0 : i32
    return %c0_i32, %c0_i32_0 : i32, i32
  }
  func.func @transform_13(%arg0: i32) -> (i32, i32) {
    %c0_i32 = arith.constant 0 : i32
    %c0_i32_0 = arith.constant 0 : i32
    %c0_i32_1 = arith.constant 0 : i32
    return %c0_i32, %c0_i32_0 : i32, i32
  }
  func.func @transform_14(%arg0: i32) -> (i32, i32) {
    %c0_i32 = arith.constant 0 : i32
    %c0_i32_0 = arith.constant 0 : i32
    return %arg0, %c0_i32 : i32, i32
  }
}

</mosaic_0001>

<llo_original>
// kernel: tpu_custom_call.1
$region0: #{tpu_custom_call.1}
  #allocation0 [shape = 'u32[]', space=smem, size = 0x4, offset = 0x4, fixed_abs, tag = 'smem constant byte address 0x4 - core index']
  #allocation1 [shape = 'u32[144,128]{1,0:T(1,128)}', space=vmem, size = 0x12000, scoped, tag = 'internal scratch']
  %s0 = inlined_call_operand.hbm [shape: f32[16,32], index: 0, kind: input, shape index: {}]
  %s1 = inlined_call_operand.vmem [shape: f32[32,64], index: 1, kind: input, shape index: {}]
  %s2 = inlined_call_operand.vmem [shape: f32[1,64], index: 2, kind: input, shape index: {}]
  %s3 = inlined_call_operand.hbm [shape: f32[32,64], index: 3, kind: input, shape index: {}]
  %s4 = inlined_call_operand.hbm [shape: f32[1,64], index: 4, kind: input, shape index: {}]
  %s5 = inlined_call_operand.vmem [shape: f32[4,64], index: 5, kind: input, shape index: {}]
  %s6 = inlined_call_operand.hbm [shape: f32[1,64], index: 6, kind: input, shape index: {}]
  %s7 = inlined_call_operand.vmem [shape: f32[64,64], index: 7, kind: input, shape index: {}]
  %s8 = inlined_call_operand.hbm [shape: f32[1,64], index: 8, kind: input, shape index: {}]
  %s9 = inlined_call_operand.hbm [shape: f32[1,64], index: 9, kind: input, shape index: {}]
  %s10 = inlined_call_operand.vmem [shape: f32[64,32], index: 10, kind: input, shape index: {}]
  %s11 = inlined_call_operand.vmem [shape: f32[1,32], index: 11, kind: input, shape index: {}]
  %s12 = inlined_call_operand.vmem [shape: f32[1,32], index: 12, kind: input, shape index: {}]
  %s13 = inlined_call_operand.vmem [shape: f32[1,32], index: 13, kind: input, shape index: {}]
  %s14 = inlined_call_operand.hbm [shape: f32[16,32], index: 14, kind: output, shape index: {}]
  %s15 = sld [smem:[#allocation0]]
  $region113: #{tpu_custom_call.1} parent=0
    _
  %s17 = ssub.s32 1, %s15
  %s18 = scalar_select 0, %s17, %s15
  $region1: #{tpu_custom_call.1} parent=0
    #allocation2 [shape = 'u8[8192]{0}', space=vmem, size = 0x2000, scoped, tag = 'input window, operand 0']
    #allocation3 [shape = 's32[2]{0}', space=sflag, size = 0x8, scoped, tag = 'scoped memory for tpu_custom_call.1']
    #allocation4 [shape = 's32[2]{0}', space=sflag, size = 0x8, scoped, tag = 'scoped memory for tpu_custom_call.1']
    #allocation5 [shape = 'u8[16384]{0}', space=vmem, size = 0x4000, scoped, tag = 'input window, operand 3, single buffered']
    #allocation6 [shape = 's32[1]{0}', space=sflag, size = 0x4, scoped, tag = 'scoped memory for tpu_custom_call.1']
    #allocation7 [shape = 'u8[512]{0}', space=vmem, size = 0x400, scoped, tag = 'input window, operand 4, single buffered']
    #allocation8 [shape = 'u8[512]{0}', space=vmem, size = 0x400, scoped, tag = 'input window, operand 6, single buffered']
    #allocation9 [shape = 's32[1]{0}', space=sflag, size = 0x4, scoped, tag = 'scoped memory for tpu_custom_call.1']
    #allocation10 [shape = 'u8[512]{0}', space=vmem, size = 0x400, scoped, tag = 'input window, operand 8, single buffered']
    #allocation11 [shape = 'u8[512]{0}', space=vmem, size = 0x400, scoped, tag = 'input window, operand 9, single buffered']
    #allocation12 [shape = 's32[1]{0}', space=sflag, size = 0x4, scoped, tag = 'scoped memory for tpu_custom_call.1']
    #allocation13 [shape = 'u8[8192]{0}', space=vmem, size = 0x2000, scoped, tag = 'output window, operand 0']
    %19 = vsyncpa [#allocation3], 0
    %s20 = scalar_lea.sflag [#allocation3], 1
    %21 = vsyncpa %s20, 0
    %22 = vsyncpa [#allocation6], 0
    %23 = vsyncpa [#allocation9], 0
    %24 = vsyncpa [#allocation12], 0
    %25 = vsyncpa [#allocation4], 0
    %s26 = scalar_lea.sflag [#allocation4], 1
    %27 = vsyncpa %s26, 0
    loop: start=0, step=1, limit=4
    $region2: #{tpu_custom_call.1} parent=1 // loop_pre_header
      _
    $region3: #{tpu_custom_call.1} parent=1 // loop_header
      %s29 = sphi 0, %s33
      %p30 = scmp.ge.s32.totalorder %s29, 4
      %s39 = sphi 0, %s41
      %s42 = sphi 0, %s39
      %s43 = sphi 0, %s42
      %s59 = sphi 0, %s43
      %s63 = sphi 0, %s63
      %s65 = sphi 0, %s63
      %s66 = sphi 0, %s65
      %s80 = sphi 0, %s66
      %s84 = sphi 0, %s84
      %s86 = sphi 0, %s84
      %s87 = sphi 0, %s86
      %s101 = sphi 0, %s87
      %s105 = sphi 0, %s105
      %s107 = sphi 0, %s105
      %s108 = sphi 0, %s107
      %s122 = sphi 0, %s108
      %s126 = sphi 0, %s126
      %s128 = sphi 0, %s126
      %s129 = sphi 0, %s128
      %s143 = sphi 0, %s129
      %s147 = sphi 0, %s147
      %s149 = sphi 0, %s147
      %s150 = sphi 0, %s149
      %s164 = sphi 0, %s150
      %s168 = sphi 0, %s168
      %s170 = sphi 0, %s168
      %s171 = sphi 0, %s170
      %s185 = sphi 0, %s171
      %s189 = sphi 0, %s189
      %s191 = sphi 0, %s189
      %s192 = sphi 0, %s191
      %s206 = sphi 0, %s192
      %s210 = sphi 0, %s210
      %s212 = sphi 0, %s210
      %s213 = sphi 0, %s212
      %s227 = sphi 0, %s213
      %s231 = sphi 0, %s231
      %s233 = sphi 0, %s231
      %s234 = sphi 0, %s233
      %s248 = sphi 0, %s234
      %s252 = sphi 0, %s252
      %s254 = sphi 0, %s252
      %s255 = sphi 0, %s254
      %s269 = sphi 0, %s255
      %s273 = sphi 0, %s273
      %s275 = sphi 0, %s273
      %s276 = sphi 0, %s275
      %s290 = sphi 0, %s276
      %s294 = sphi 0, %s294
      %s296 = sphi 0, %s294
      %s297 = sphi 0, %s296
      %s311 = sphi 0, %s297
      %s315 = sphi 0, %s315
      %s317 = sphi 0, %s315
      %s318 = sphi 0, %s317
      %s332 = sphi 0, %s318
      %s338 = sphi 0, %s340
      %s341 = sphi 0, %s338
      %s342 = sphi 0, %s341
      %s358 = sphi 0, %s342
    $region4: #{tpu_custom_call.1} parent=1 // loop_header_branch
      %32 = sbr.rel (%p30) target = $region8
    $region5: #{tpu_custom_call.1} parent=1 // loop_body
      %s34 = ssub.s32 %s29, 1
      %s35 = ssub.s32 %s29, 2
      %s36 = sadd.s32 %s29, 1
      %s37 = ssub.s32 %s29, %s36
      %p38 = scmp.eq.s32.totalorder %s37, 0
      %s40 = sadd.s32 %s39, 1
      %s41 = scalar_select %p38, %s39, %s40
      %p44 = pneg %p38
      %p45 = scmp.eq.s32.totalorder %s29, 1
      %p46 = por %p44, %p45
      %p47 = scmp.ne.s32.totalorder %s39, %s42
      %p48 = scmp.eq.s32.totalorder %s29, 0
      %p49 = por %p47, %p48
      %p50 = scmp.ne.s32.totalorder %s39, %s42
      %p51 = scmp.eq.s32.totalorder %s34, 1
      %p52 = por %p50, %p51
      %p53 = scmp.ne.s32.totalorder %s42, %s43
      %p54 = scmp.eq.s32.totalorder %s34, 0
      %p55 = por %p53, %p54
      %p56 = scmp.ne.s32.totalorder %s42, %s43
      %p57 = scmp.eq.s32.totalorder %s35, 1
      %p58 = por %p56, %p57
      %p60 = scmp.ne.s32.totalorder %s43, %s59
      %p61 = scmp.eq.s32.totalorder %s35, 0
      %p62 = por %p60, %p61
      %s64 = sadd.s32 %s63, 1
      %p67 = scmp.eq.s32.totalorder %s29, 1
      %p68 = scmp.ne.s32.totalorder %s63, %s65
      %p69 = scmp.eq.s32.totalorder %s29, 0
      %p70 = por %p68, %p69
      %p71 = scmp.ne.s32.totalorder %s63, %s65
      %p72 = scmp.eq.s32.totalorder %s34, 1
      %p73 = por %p71, %p72
      %p74 = scmp.ne.s32.totalorder %s65, %s66
      %p75 = scmp.eq.s32.totalorder %s34, 0
      %p76 = por %p74, %p75
      %p77 = scmp.ne.s32.totalorder %s65, %s66
      %p78 = scmp.eq.s32.totalorder %s35, 1
      %p79 = por %p77, %p78
      %p81 = scmp.ne.s32.totalorder %s66, %s80
      %p82 = scmp.eq.s32.totalorder %s35, 0
      %p83 = por %p81, %p82
      %s85 = sadd.s32 %s84, 1
      %p88 = scmp.eq.s32.totalorder %s29, 1
      %p89 = scmp.ne.s32.totalorder %s84, %s86
      %p90 = scmp.eq.s32.totalorder %s29, 0
      %p91 = por %p89, %p90
      %p92 = scmp.ne.s32.totalorder %s84, %s86
      %p93 = scmp.eq.s32.totalorder %s34, 1
      %p94 = por %p92, %p93
      %p95 = scmp.ne.s32.totalorder %s86, %s87
      %p96 = scmp.eq.s32.totalorder %s34, 0
      %p97 = por %p95, %p96
      %p98 = scmp.ne.s32.totalorder %s86, %s87
      %p99 = scmp.eq.s32.totalorder %s35, 1
      %p100 = por %p98, %p99
      %p102 = scmp.ne.s32.totalorder %s87, %s101
      %p103 = scmp.eq.s32.totalorder %s35, 0
      %p104 = por %p102, %p103
      %s106 = sadd.s32 %s105, 1
      %p109 = scmp.eq.s32.totalorder %s29, 1
      %p110 = scmp.ne.s32.totalorder %s105, %s107
      %p111 = scmp.eq.s32.totalorder %s29, 0
      %p112 = por %p110, %p111
      %p113 = scmp.ne.s32.totalorder %s105, %s107
      %p114 = scmp.eq.s32.totalorder %s34, 1
      %p115 = por %p113, %p114
      %p116 = scmp.ne.s32.totalorder %s107, %s108
      %p117 = scmp.eq.s32.totalorder %s34, 0
      %p118 = por %p116, %p117
      %p119 = scmp.ne.s32.totalorder %s107, %s108
      %p120 = scmp.eq.s32.totalorder %s35, 1
      %p121 = por %p119, %p120
      %p123 = scmp.ne.s32.totalorder %s108, %s122
      %p124 = scmp.eq.s32.totalorder %s35, 0
      %p125 = por %p123, %p124
      %s127 = sadd.s32 %s126, 1
      %p130 = scmp.eq.s32.totalorder %s29, 1
      %p131 = scmp.ne.s32.totalorder %s126, %s128
      %p132 = scmp.eq.s32.totalorder %s29, 0
      %p133 = por %p131, %p132
      %p134 = scmp.ne.s32.totalorder %s126, %s128
      %p135 = scmp.eq.s32.totalorder %s34, 1
      %p136 = por %p134, %p135
      %p137 = scmp.ne.s32.totalorder %s128, %s129
      %p138 = scmp.eq.s32.totalorder %s34, 0
      %p139 = por %p137, %p138
      %p140 = scmp.ne.s32.totalorder %s128, %s129
      %p141 = scmp.eq.s32.totalorder %s35, 1
      %p142 = por %p140, %p141
      %p144 = scmp.ne.s32.totalorder %s129, %s143
      %p145 = scmp.eq.s32.totalorder %s35, 0
      %p146 = por %p144, %p145
      %s148 = sadd.s32 %s147, 1
      %p151 = scmp.eq.s32.totalorder %s29, 1
      %p152 = scmp.ne.s32.totalorder %s147, %s149
      %p153 = scmp.eq.s32.totalorder %s29, 0
      %p154 = por %p152, %p153
      %p155 = scmp.ne.s32.totalorder %s147, %s149
      %p156 = scmp.eq.s32.totalorder %s34, 1
      %p157 = por %p155, %p156
      %p158 = scmp.ne.s32.totalorder %s149, %s150
      %p159 = scmp.eq.s32.totalorder %s34, 0
      %p160 = por %p158, %p159
      %p161 = scmp.ne.s32.totalorder %s149, %s150
      %p162 = scmp.eq.s32.totalorder %s35, 1
      %p163 = por %p161, %p162
      %p165 = scmp.ne.s32.totalorder %s150, %s164
      %p166 = scmp.eq.s32.totalorder %s35, 0
      %p167 = por %p165, %p166
      %s169 = sadd.s32 %s168, 1
      %p172 = scmp.eq.s32.totalorder %s29, 1
      %p173 = scmp.ne.s32.totalorder %s168, %s170
      %p174 = scmp.eq.s32.totalorder %s29, 0
      %p175 = por %p173, %p174
      %p176 = scmp.ne.s32.totalorder %s168, %s170
      %p177 = scmp.eq.s32.totalorder %s34, 1
      %p178 = por %p176, %p177
      %p179 = scmp.ne.s32.totalorder %s170, %s171
      %p180 = scmp.eq.s32.totalorder %s34, 0
      %p181 = por %p179, %p180
      %p182 = scmp.ne.s32.totalorder %s170, %s171
      %p183 = scmp.eq.s32.totalorder %s35, 1
      %p184 = por %p182, %p183
      %p186 = scmp.ne.s32.totalorder %s171, %s185
      %p187 = scmp.eq.s32.totalorder %s35, 0
      %p188 = por %p186, %p187
      %s190 = sadd.s32 %s189, 1
      %p193 = scmp.eq.s32.totalorder %s29, 1
      %p194 = scmp.ne.s32.totalorder %s189, %s191
      %p195 = scmp.eq.s32.totalorder %s29, 0
      %p196 = por %p194, %p195
      %p197 = scmp.ne.s32.totalorder %s189, %s191
      %p198 = scmp.eq.s32.totalorder %s34, 1
      %p199 = por %p197, %p198
      %p200 = scmp.ne.s32.totalorder %s191, %s192
      %p201 = scmp.eq.s32.totalorder %s34, 0
      %p202 = por %p200, %p201
      %p203 = scmp.ne.s32.totalorder %s191, %s192
      %p204 = scmp.eq.s32.totalorder %s35, 1
      %p205 = por %p203, %p204
      %p207 = scmp.ne.s32.totalorder %s192, %s206
      %p208 = scmp.eq.s32.totalorder %s35, 0
      %p209 = por %p207, %p208
      %s211 = sadd.s32 %s210, 1
      %p214 = scmp.eq.s32.totalorder %s29, 1
      %p215 = scmp.ne.s32.totalorder %s210, %s212
      %p216 = scmp.eq.s32.totalorder %s29, 0
      %p217 = por %p215, %p216
      %p218 = scmp.ne.s32.totalorder %s210, %s212
      %p219 = scmp.eq.s32.totalorder %s34, 1
      %p220 = por %p218, %p219
      %p221 = scmp.ne.s32.totalorder %s212, %s213
      %p222 = scmp.eq.s32.totalorder %s34, 0
      %p223 = por %p221, %p222
      %p224 = scmp.ne.s32.totalorder %s212, %s213
      %p225 = scmp.eq.s32.totalorder %s35, 1
      %p226 = por %p224, %p225
      %p228 = scmp.ne.s32.totalorder %s213, %s227
      %p229 = scmp.eq.s32.totalorder %s35, 0
      %p230 = por %p228, %p229
      %s232 = sadd.s32 %s231, 1
      %p235 = scmp.eq.s32.totalorder %s29, 1
      %p236 = scmp.ne.s32.totalorder %s231, %s233
      %p237 = scmp.eq.s32.totalorder %s29, 0
      %p238 = por %p236, %p237
      %p239 = scmp.ne.s32.totalorder %s231, %s233
      %p240 = scmp.eq.s32.totalorder %s34, 1
      %p241 = por %p239, %p240
      %p242 = scmp.ne.s32.totalorder %s233, %s234
      %p243 = scmp.eq.s32.totalorder %s34, 0
      %p244 = por %p242, %p243
      %p245 = scmp.ne.s32.totalorder %s233, %s234
      %p246 = scmp.eq.s32.totalorder %s35, 1
      %p247 = por %p245, %p246
      %p249 = scmp.ne.s32.totalorder %s234, %s248
      %p250 = scmp.eq.s32.totalorder %s35, 0
      %p251 = por %p249, %p250
      %s253 = sadd.s32 %s252, 1
      %p256 = scmp.eq.s32.totalorder %s29, 1
      %p257 = scmp.ne.s32.totalorder %s252, %s254
      %p258 = scmp.eq.s32.totalorder %s29, 0
      %p259 = por %p257, %p258
      %p260 = scmp.ne.s32.totalorder %s252, %s254
      %p261 = scmp.eq.s32.totalorder %s34, 1
      %p262 = por %p260, %p261
      %p263 = scmp.ne.s32.totalorder %s254, %s255
      %p264 = scmp.eq.s32.totalorder %s34, 0
      %p265 = por %p263, %p264
      %p266 = scmp.ne.s32.totalorder %s254, %s255
      %p267 = scmp.eq.s32.totalorder %s35, 1
      %p268 = por %p266, %p267
      %p270 = scmp.ne.s32.totalorder %s255, %s269
      %p271 = scmp.eq.s32.totalorder %s35, 0
      %p272 = por %p270, %p271
      %s274 = sadd.s32 %s273, 1
      %p277 = scmp.eq.s32.totalorder %s29, 1
      %p278 = scmp.ne.s32.totalorder %s273, %s275
      %p279 = scmp.eq.s32.totalorder %s29, 0
      %p280 = por %p278, %p279
      %p281 = scmp.ne.s32.totalorder %s273, %s275
      %p282 = scmp.eq.s32.totalorder %s34, 1
      %p283 = por %p281, %p282
      %p284 = scmp.ne.s32.totalorder %s275, %s276
      %p285 = scmp.eq.s32.totalorder %s34, 0
      %p286 = por %p284, %p285
      %p287 = scmp.ne.s32.totalorder %s275, %s276
      %p288 = scmp.eq.s32.totalorder %s35, 1
      %p289 = por %p287, %p288
      %p291 = scmp.ne.s32.totalorder %s276, %s290
      %p292 = scmp.eq.s32.totalorder %s35, 0
      %p293 = por %p291, %p292
      %s295 = sadd.s32 %s294, 1
      %p298 = scmp.eq.s32.totalorder %s29, 1
      %p299 = scmp.ne.s32.totalorder %s294, %s296
      %p300 = scmp.eq.s32.totalorder %s29, 0
      %p301 = por %p299, %p300
      %p302 = scmp.ne.s32.totalorder %s294, %s296
      %p303 = scmp.eq.s32.totalorder %s34, 1
      %p304 = por %p302, %p303
      %p305 = scmp.ne.s32.totalorder %s296, %s297
      %p306 = scmp.eq.s32.totalorder %s34, 0
      %p307 = por %p305, %p306
      %p308 = scmp.ne.s32.totalorder %s296, %s297
      %p309 = scmp.eq.s32.totalorder %s35, 1
      %p310 = por %p308, %p309
      %p312 = scmp.ne.s32.totalorder %s297, %s311
      %p313 = scmp.eq.s32.totalorder %s35, 0
      %p314 = por %p312, %p313
      %s316 = sadd.s32 %s315, 1
      %p319 = scmp.eq.s32.totalorder %s29, 1
      %p320 = scmp.ne.s32.totalorder %s315, %s317
      %p321 = scmp.eq.s32.totalorder %s29, 0
      %p322 = por %p320, %p321
      %p323 = scmp.ne.s32.totalorder %s315, %s317
      %p324 = scmp.eq.s32.totalorder %s34, 1
      %p325 = por %p323, %p324
      %p326 = scmp.ne.s32.totalorder %s317, %s318
      %p327 = scmp.eq.s32.totalorder %s34, 0
      %p328 = por %p326, %p327
      %p329 = scmp.ne.s32.totalorder %s317, %s318
      %p330 = scmp.eq.s32.totalorder %s35, 1
      %p331 = por %p329, %p330
      %p333 = scmp.ne.s32.totalorder %s318, %s332
      %p334 = scmp.eq.s32.totalorder %s35, 0
      %p335 = por %p333, %p334
      %s336 = ssub.s32 %s29, %s36
      %p337 = scmp.eq.s32.totalorder %s336, 0
      %s339 = sadd.s32 %s338, 1
      %s340 = scalar_select %p337, %s338, %s339
      %p343 = pneg %p337
      %p344 = scmp.eq.s32.totalorder %s29, 1
      %p345 = por %p343, %p344
      %p346 = scmp.ne.s32.totalorder %s338, %s341
      %p347 = scmp.eq.s32.totalorder %s29, 0
      %p348 = por %p346, %p347
      %p349 = scmp.ne.s32.totalorder %s338, %s341
      %p350 = scmp.eq.s32.totalorder %s34, 1
      %p351 = por %p349, %p350
      %p352 = scmp.ne.s32.totalorder %s341, %s342
      %p353 = scmp.eq.s32.totalorder %s34, 0
      %p354 = por %p352, %p353
      %p355 = scmp.ne.s32.totalorder %s341, %s342
      %p356 = scmp.eq.s32.totalorder %s35, 1
      %p357 = por %p355, %p356
      %p359 = scmp.ne.s32.totalorder %s342, %s358
      %p360 = scmp.eq.s32.totalorder %s35, 0
      %p361 = por %p359, %p360
      %p362 = scmp.le.s32.totalorder 1, %s29
      %p363 = scmp.lt.s32.totalorder %s29, 3
      %p364 = pnand %p362, %p363
      %p365 = pneg %p364
      // Predicated region
      $region9: #{tpu_custom_call.1} parent=5 // pred_check
        _
      $region10: #{tpu_custom_call.1} parent=5 // pred_check_branch
        %367 = sbr.rel (%p364) target = $region12
      $region11: #{tpu_custom_call.1} parent=5 // pred_region
        %s368 = ssub.s32 %s29, 1
        // Predicated region
        $region13: #{tpu_custom_call.1} parent=11 // pred_check
          %p369 = pneg %p76
        $region14: #{tpu_custom_call.1} parent=11 // pred_check_branch
          %371 = sbr.rel (%p369) target = $region16
        $region15: #{tpu_custom_call.1} parent=11 // pred_region
          _
        $region16: #{tpu_custom_call.1} parent=11 // pred_fallthru
          _
        // Predicated region
        $region17: #{tpu_custom_call.1} parent=11 // pred_check
          %p372 = pneg %p97
        $region18: #{tpu_custom_call.1} parent=11 // pred_check_branch
          %374 = sbr.rel (%p372) target = $region20
        $region19: #{tpu_custom_call.1} parent=11 // pred_region
          _
        $region20: #{tpu_custom_call.1} parent=11 // pred_fallthru
          _
        // Predicated region
        $region21: #{tpu_custom_call.1} parent=11 // pred_check
          %p375 = pneg %p118
        $region22: #{tpu_custom_call.1} parent=11 // pred_check_branch
          %377 = sbr.rel (%p375) target = $region24
        $region23: #{tpu_custom_call.1} parent=11 // pred_region
          %s379 = ssub.s32 512, 512
          %380 = vsyncadd [#allocation6], %s379
          %s381 = sshll.u32 [#allocation5], 4
          %s382 = int_to_ptr.vmem [resolvable:$true] %s381
          %387 = dma.hbm_to_vmem [thread:$0]  %s3, 512, %s382, [#allocation6], 128, 128, 8
        $region24: #{tpu_custom_call.1} parent=11 // pred_fallthru
          _
        // Predicated region
        $region25: #{tpu_custom_call.1} parent=11 // pred_check
          %p388 = pneg %p139
        $region26: #{tpu_custom_call.1} parent=11 // pred_check_branch
          %390 = sbr.rel (%p388) target = $region28
        $region27: #{tpu_custom_call.1} parent=11 // pred_region
          %s392 = ssub.s32 16, 16
          %393 = vsyncadd [#allocation6], %s392
          %s395 = sshll.u32 [#allocation7], 4
          %s396 = int_to_ptr.vmem [resolvable:$true] %s395
          %398 = dma.hbm_to_vmem [thread:$0]  %s4, 16, %s396, [#allocation6]
        $region28: #{tpu_custom_call.1} parent=11 // pred_fallthru
          _
        // Predicated region
        $region29: #{tpu_custom_call.1} parent=11 // pred_check
          %p399 = pneg %p160
        $region30: #{tpu_custom_call.1} parent=11 // pred_check_branch
          %401 = sbr.rel (%p399) target = $region32
        $region31: #{tpu_custom_call.1} parent=11 // pred_region
          _
        $region32: #{tpu_custom_call.1} parent=11 // pred_fallthru
          _
        // Predicated region
        $region33: #{tpu_custom_call.1} parent=11 // pred_check
          %p402 = pneg %p181
        $region34: #{tpu_custom_call.1} parent=11 // pred_check_branch
          %404 = sbr.rel (%p402) target = $region36
        $region35: #{tpu_custom_call.1} parent=11 // pred_region
          %s406 = ssub.s32 16, 16
          %407 = vsyncadd [#allocation9], %s406
          %s409 = sshll.u32 [#allocation8], 4
          %s410 = int_to_ptr.vmem [resolvable:$true] %s409
          %412 = dma.hbm_to_vmem [thread:$0]  %s6, 16, %s410, [#allocation9]
        $region36: #{tpu_custom_call.1} parent=11 // pred_fallthru
          _
        // Predicated region
        $region37: #{tpu_custom_call.1} parent=11 // pred_check
          %p413 = pneg %p202
        $region38: #{tpu_custom_call.1} parent=11 // pred_check_branch
          %415 = sbr.rel (%p413) target = $region40
        $region39: #{tpu_custom_call.1} parent=11 // pred_region
          _
        $region40: #{tpu_custom_call.1} parent=11 // pred_fallthru
          _
        // Predicated region
        $region41: #{tpu_custom_call.1} parent=11 // pred_check
          %p416 = pneg %p223
        $region42: #{tpu_custom_call.1} parent=11 // pred_check_branch
          %418 = sbr.rel (%p416) target = $region44
        $region43: #{tpu_custom_call.1} parent=11 // pred_region
          %s420 = ssub.s32 16, 16
          %421 = vsyncadd [#allocation9], %s420
          %s423 = sshll.u32 [#allocation10], 4
          %s424 = int_to_ptr.vmem [resolvable:$true] %s423
          %426 = dma.hbm_to_vmem [thread:$0]  %s8, 16, %s424, [#allocation9]
        $region44: #{tpu_custom_call.1} parent=11 // pred_fallthru
          _
        // Predicated region
        $region45: #{tpu_custom_call.1} parent=11 // pred_check
          %p427 = pneg %p244
        $region46: #{tpu_custom_call.1} parent=11 // pred_check_branch
          %429 = sbr.rel (%p427) target = $region48
        $region47: #{tpu_custom_call.1} parent=11 // pred_region
          %s431 = ssub.s32 16, 16
          %432 = vsyncadd [#allocation12], %s431
          %s434 = sshll.u32 [#allocation11], 4
          %s435 = int_to_ptr.vmem [resolvable:$true] %s434
          %437 = dma.hbm_to_vmem [thread:$0]  %s9, 16, %s435, [#allocation12]
        $region48: #{tpu_custom_call.1} parent=11 // pred_fallthru
          _
        // Predicated region
        $region49: #{tpu_custom_call.1} parent=11 // pred_check
          %p438 = pneg %p265
        $region50: #{tpu_custom_call.1} parent=11 // pred_check_branch
          %440 = sbr.rel (%p438) target = $region52
        $region51: #{tpu_custom_call.1} parent=11 // pred_region
          _
        $region52: #{tpu_custom_call.1} parent=11 // pred_fallthru
          _
        // Predicated region
        $region53: #{tpu_custom_call.1} parent=11 // pred_check
          %p441 = pneg %p286
        $region54: #{tpu_custom_call.1} parent=11 // pred_check_branch
          %443 = sbr.rel (%p441) target = $region56
        $region55: #{tpu_custom_call.1} parent=11 // pred_region
          _
        $region56: #{tpu_custom_call.1} parent=11 // pred_fallthru
          _
        // Predicated region
        $region57: #{tpu_custom_call.1} parent=11 // pred_check
          %p444 = pneg %p307
        $region58: #{tpu_custom_call.1} parent=11 // pred_check_branch
          %446 = sbr.rel (%p444) target = $region60
        $region59: #{tpu_custom_call.1} parent=11 // pred_region
          _
        $region60: #{tpu_custom_call.1} parent=11 // pred_fallthru
          _
        // Predicated region
        $region61: #{tpu_custom_call.1} parent=11 // pred_check
          %p447 = pneg %p328
        $region62: #{tpu_custom_call.1} parent=11 // pred_check_branch
          %449 = sbr.rel (%p447) target = $region64
        $region63: #{tpu_custom_call.1} parent=11 // pred_region
          _
        $region64: #{tpu_custom_call.1} parent=11 // pred_fallthru
          _
      $region12: #{tpu_custom_call.1} parent=5 // pred_fallthru
        _
      %p450 = scmp.lt.s32.totalorder %s29, 2
      // Predicated region
      $region65: #{tpu_custom_call.1} parent=5 // pred_check
        %p451 = pneg %p450
      $region66: #{tpu_custom_call.1} parent=5 // pred_check_branch
        %453 = sbr.rel (%p451) target = $region68
      $region67: #{tpu_custom_call.1} parent=5 // pred_region
        // Predicated region
        $region69: #{tpu_custom_call.1} parent=67 // pred_check
          %p454 = pneg %p49
        $region70: #{tpu_custom_call.1} parent=67 // pred_check_branch
          %456 = sbr.rel (%p454) target = $region72
        $region71: #{tpu_custom_call.1} parent=67 // pred_region
          %s457 = sand.u32 %s39, 1
          %s458 = scalar_lea.sflag [#allocation3], %s457
          %s459 = sand.u32 %s39, 1
          %s460 = smul.addr %s459, 8
          %s461 = scalar_lea.vmem [#allocation2], %s460
          %s463 = ssub.s32 128, 128
          %464 = vsyncadd %s458, %s463
          %s465 = smul.addr %s29, 128
          %s466 = scalar_lea.hbm %s0, %s465
          %s468 = sshll.u32 %s461, 4
          %s469 = int_to_ptr.vmem [resolvable:$true] %s468
          %471 = dma.hbm_to_vmem [thread:$0]  %s466, 128, %s469, %s458
        $region72: #{tpu_custom_call.1} parent=67 // pred_fallthru
          _
      $region68: #{tpu_custom_call.1} parent=5 // pred_fallthru
        _
      %p472 = scmp.le.s32.totalorder 1, %s29
      %p473 = scmp.lt.s32.totalorder %s29, 3
      %p474 = pnand %p472, %p473
      %p475 = pneg %p474
      // Predicated region
      $region73: #{tpu_custom_call.1} parent=5 // pred_check
        _
      $region74: #{tpu_custom_call.1} parent=5 // pred_check_branch
        %477 = sbr.rel (%p474) target = $region76
      $region75: #{tpu_custom_call.1} parent=5 // pred_region
        %s478 = ssub.s32 %s29, 1
        %s479 = sand.u32 %s42, 1
        %s480 = scalar_lea.sflag [#allocation3], %s479
        %s481 = sand.u32 %s42, 1
        %s482 = smul.addr %s481, 8
        %s483 = scalar_lea.vmem [#allocation2], %s482
        // Predicated region
        $region77: #{tpu_custom_call.1} parent=75 // pred_check
          %p484 = pneg %p55
        $region78: #{tpu_custom_call.1} parent=75 // pred_check_branch
          %486 = sbr.rel (%p484) target = $region80
        $region79: #{tpu_custom_call.1} parent=75 // pred_region
          %487 = dma.done %s480, 128
        $region80: #{tpu_custom_call.1} parent=75 // pred_fallthru
          _
        // Predicated region
        $region81: #{tpu_custom_call.1} parent=75 // pred_check
          %p488 = pneg %p118
        $region82: #{tpu_custom_call.1} parent=75 // pred_check_branch
          %490 = sbr.rel (%p488) target = $region84
        $region83: #{tpu_custom_call.1} parent=75 // pred_region
          %491 = dma.done [#allocation6], 512
        $region84: #{tpu_custom_call.1} parent=75 // pred_fallthru
          _
        // Predicated region
        $region85: #{tpu_custom_call.1} parent=75 // pred_check
          %p492 = pneg %p139
        $region86: #{tpu_custom_call.1} parent=75 // pred_check_branch
          %494 = sbr.rel (%p492) target = $region88
        $region87: #{tpu_custom_call.1} parent=75 // pred_region
          %495 = dma.done [#allocation6], 16
        $region88: #{tpu_custom_call.1} parent=75 // pred_fallthru
          _
        // Predicated region
        $region89: #{tpu_custom_call.1} parent=75 // pred_check
          %p496 = pneg %p181
        $region90: #{tpu_custom_call.1} parent=75 // pred_check_branch
          %498 = sbr.rel (%p496) target = $region92
        $region91: #{tpu_custom_call.1} parent=75 // pred_region
          %499 = dma.done [#allocation9], 16
        $region92: #{tpu_custom_call.1} parent=75 // pred_fallthru
          _
        // Predicated region
        $region93: #{tpu_custom_call.1} parent=75 // pred_check
          %p500 = pneg %p223
        $region94: #{tpu_custom_call.1} parent=75 // pred_check_branch
          %502 = sbr.rel (%p500) target = $region96
        $region95: #{tpu_custom_call.1} parent=75 // pred_region
          %503 = dma.done [#allocation9], 16
        $region96: #{tpu_custom_call.1} parent=75 // pred_fallthru
          _
        // Predicated region
        $region97: #{tpu_custom_call.1} parent=75 // pred_check
          %p504 = pneg %p244
        $region98: #{tpu_custom_call.1} parent=75 // pred_check_branch
          %506 = sbr.rel (%p504) target = $region100
        $region99: #{tpu_custom_call.1} parent=75 // pred_region
          %507 = dma.done [#allocation12], 16
        $region100: #{tpu_custom_call.1} parent=75 // pred_fallthru
          _
        %s508 = sand.u32 %s42, 1
        %s509 = scalar_lea.sflag [#allocation3], %s508
        %s510 = sand.u32 %s42, 1
        %s511 = smul.addr %s510, 8
        %s512 = scalar_lea.vmem [#allocation2], %s511
        %p513 = pneg %p55
        %p514 = pneg %p52
        %p515 = pneg %p76
        %p516 = pneg %p73
        %p517 = pneg %p97
        %p518 = pneg %p94
        %p519 = pneg %p118
        %p520 = pneg %p115
        %p521 = pneg %p139
        %p522 = pneg %p136
        %p523 = pneg %p160
        %p524 = pneg %p157
        %p525 = pneg %p181
        %p526 = pneg %p178
        %p527 = pneg %p202
        %p528 = pneg %p199
        %p529 = pneg %p223
        %p530 = pneg %p220
        %p531 = pneg %p244
        %p532 = pneg %p241
        %p533 = pneg %p265
        %p534 = pneg %p262
        %p535 = pneg %p286
        %p536 = pneg %p283
        %p537 = pneg %p307
        %p538 = pneg %p304
        %p539 = pneg %p328
        %p540 = pneg %p325
        %p541 = pneg %p354
        %p542 = pneg %p351
        %s543 = sand.u32 %s341, 1
        %s544 = scalar_lea.sflag [#allocation4], %s543
        %s545 = sand.u32 %s341, 1
        %s546 = smul.addr %s545, 8
        %s547 = scalar_lea.vmem [#allocation13], %s546
        %v548 = vld [vmem:[%s483] sm:$0xff]
        %v549 = vlaneseq
        %v550 = vshrl.u32 %v549, 7
        %v551 = vand.u32 %v550, 7
        %vm552 = vcmp.lt.s32.totalorder %v551, 1
        %vm553 = vcmp.lt.s32.totalorder %v551, 2
        %vm554 = vcmp.lt.s32.totalorder %v551, 3
        %vm555 = vcmp.lt.s32.totalorder %v551, 4
        %v556 = vld [vmem:[%s1] sm:$0xff]
        %v557 = vld [vmem:[%s1 + $0x8] sm:$0xff]
        %v558 = vld [vmem:[%s1 + $0x10] sm:$0xff]
        %v559 = vld [vmem:[%s1 + $0x18] sm:$0xff]
        %v560 = vld [vmem:[%s2] sm:$0x1]
        %v562 = vlaneseq
        %v563 = vshrl.u32 %v562, 7
        %v564 = vsub.s32 0, %v563
        %v565 = vrot.slane %v560, %v564
        %vm567 = vcmask 261120
        %v569 = vsel %vm567, %v548, 0
        %571 = vmatprep.subr.mxu0 0.0
        %572 = vmatpush1.msra.mxu0 %v556
        %573 = vmatprep.subr.mxu0 0.0
        %574 = vmatpush1.msra.mxu0 %v557
        %575 = vmatprep.subr.mxu0 0.0
        %576 = vmatpush1.msra.mxu0 %v558
        %577 = vmatprep.subr.mxu0 0.0
        %578 = vmatpush1.msra.mxu0 %v559
        %579 = vmatprep.subr.mxu0 0.0
        %580 = vmatpush1.msra.mxu0 0.0
        %581 = vmatprep.subr.mxu0 0.0
        %582 = vmatpush1.msra.mxu0 0.0
        %583 = vmatprep.subr.mxu0 0.0
        %584 = vmatpush1.msra.mxu0 0.0
        %585 = vmatprep.subr.mxu0 0.0
        %586 = vmatpush1.msra.mxu0 0.0
        %587 = vmatprep.subr.mxu0 0.0
        %588 = vmatpush1.msra.mxu0 0.0
        %589 = vmatprep.subr.mxu0 0.0
        %590 = vmatpush1.msra.mxu0 0.0
        %591 = vmatprep.subr.mxu0 0.0
        %592 = vmatpush1.msra.mxu0 0.0
        %593 = vmatprep.subr.mxu0 0.0
        %594 = vmatpush1.msra.mxu0 0.0
        %595 = vmatprep.subr.mxu0 0.0
        %596 = vmatpush1.msra.mxu0 0.0
        %597 = vmatprep.subr.mxu0 0.0
        %598 = vmatpush1.msra.mxu0 0.0
        %599 = vmatprep.subr.mxu0 0.0
        %600 = vmatpush1.msra.mxu0 0.0
        %601 = vmatprep.subr.mxu0 0.0
        %602 = vmatpush1.msra.mxu0 0.0
        %603 = vmatprep.subr.mxu0 0.0
        %604 = vmatpush1.msra.mxu0 0.0
        %605 = vmatprep.subr.mxu0 0.0
        %606 = vmatpush1.msra.mxu0 0.0
        %607 = vmatprep.subr.mxu0 0.0
        %608 = vmatpush1.msra.mxu0 0.0
        %609 = vmatprep.subr.mxu0 0.0
        %610 = vmatpush1.msra.mxu0 0.0
        %611 = vmatprep.subr.mxu0 0.0
        %612 = vmatpush1.msra.mxu0 0.0
        %613 = vmatprep.subr.mxu0 0.0
        %614 = vmatpush1.msra.mxu0 0.0
        %615 = vmatprep.subr.mxu0 0.0
        %616 = vmatpush1.msra.mxu0 0.0
        %617 = vmatprep.subr.mxu0 0.0
        %618 = vmatpush1.msra.mxu0 0.0
        %619 = vmatprep.subr.mxu0 0.0
        %620 = vmatpush1.msra.mxu0 0.0
        %621 = vmatprep.subr.mxu0 0.0
        %622 = vmatpush1.msra.mxu0 0.0
        %623 = vmatprep.subr.mxu0 0.0
        %624 = vmatpush1.msra.mxu0 0.0
        %625 = vmatprep.subr.mxu0 0.0
        %626 = vmatpush1.msra.mxu0 0.0
        %627 = vmatprep.subr.mxu0 0.0
        %628 = vmatpush1.msra.mxu0 0.0
        %629 = vmatprep.subr.mxu0 0.0
        %630 = vmatpush1.msra.mxu0 0.0
        %631 = vmatprep.subr.mxu0 0.0
        %632 = vmatpush1.msra.mxu0 0.0
        %633 = vmatprep.subr.mxu0 0.0
        %634 = vmatpush1.msra.mxu0 0.0
        %635 = vmatprep.mubr.f32.mxu0 0.0
        %636 = vmatmul.mubr.f32.gmra.mrb[0].mxu0 %v569
        %v637 = vpop.f32.mrb[0].mxu0
        %v638 = vadd.f32 %v565, %v637
        %v639 = vpop.f32.mrb[0].mxu0
        %640 = vdwg.mxu0
        %v641 = vsub.f32 0.0, %v638
        %v642 = vmul.f32 %v641, 1.442695
        %v643 = vpow.pop %v642
        %v644 = vadd.f32 %v643, 1.0
        %v645 = vrcp.pop %v644
        %v646 = vmul.f32 %v638, %v645
        %v647 = vld [vmem:[#allocation5] sm:$0xff]
        %v648 = vld [vmem:[#allocation5 + $0x8] sm:$0xff]
        %v649 = vld [vmem:[#allocation5 + $0x10] sm:$0xff]
        %v650 = vld [vmem:[#allocation5 + $0x18] sm:$0xff]
        %v651 = vld [vmem:[#allocation7] sm:$0x1]
        %v653 = vlaneseq
        %v654 = vshrl.u32 %v653, 7
        %v655 = vsub.s32 0, %v654
        %v656 = vrot.slane %v651, %v655
        %658 = vmatprep.subr.mxu0 0.0
        %659 = vmatpush1.msra.mxu0 %v647
        %660 = vmatprep.subr.mxu0 0.0
        %661 = vmatpush1.msra.mxu0 %v648
        %662 = vmatprep.subr.mxu0 0.0
        %663 = vmatpush1.msra.mxu0 %v649
        %664 = vmatprep.subr.mxu0 0.0
        %665 = vmatpush1.msra.mxu0 %v650
        %666 = vmatprep.subr.mxu0 0.0
        %667 = vmatpush1.msra.mxu0 0.0
        %668 = vmatprep.subr.mxu0 0.0
        %669 = vmatpush1.msra.mxu0 0.0
        %670 = vmatprep.subr.mxu0 0.0
        %671 = vmatpush1.msra.mxu0 0.0
        %672 = vmatprep.subr.mxu0 0.0
        %673 = vmatpush1.msra.mxu0 0.0
        %674 = vmatprep.subr.mxu0 0.0
        %675 = vmatpush1.msra.mxu0 0.0
        %676 = vmatprep.subr.mxu0 0.0
        %677 = vmatpush1.msra.mxu0 0.0
        %678 = vmatprep.subr.mxu0 0.0
        %679 = vmatpush1.msra.mxu0 0.0
        %680 = vmatprep.subr.mxu0 0.0
        %681 = vmatpush1.msra.mxu0 0.0
        %682 = vmatprep.subr.mxu0 0.0
        %683 = vmatpush1.msra.mxu0 0.0
        %684 = vmatprep.subr.mxu0 0.0
        %685 = vmatpush1.msra.mxu0 0.0
        %686 = vmatprep.subr.mxu0 0.0
        %687 = vmatpush1.msra.mxu0 0.0
        %688 = vmatprep.subr.mxu0 0.0
        %689 = vmatpush1.msra.mxu0 0.0
        %690 = vmatprep.subr.mxu0 0.0
        %691 = vmatpush1.msra.mxu0 0.0
        %692 = vmatprep.subr.mxu0 0.0
        %693 = vmatpush1.msra.mxu0 0.0
        %694 = vmatprep.subr.mxu0 0.0
        %695 = vmatpush1.msra.mxu0 0.0
        %696 = vmatprep.subr.mxu0 0.0
        %697 = vmatpush1.msra.mxu0 0.0
        %698 = vmatprep.subr.mxu0 0.0
        %699 = vmatpush1.msra.mxu0 0.0
        %700 = vmatprep.subr.mxu0 0.0
        %701 = vmatpush1.msra.mxu0 0.0
        %702 = vmatprep.subr.mxu0 0.0
        %703 = vmatpush1.msra.mxu0 0.0
        %704 = vmatprep.subr.mxu0 0.0
        %705 = vmatpush1.msra.mxu0 0.0
        %706 = vmatprep.subr.mxu0 0.0
        %707 = vmatpush1.msra.mxu0 0.0
        %708 = vmatprep.subr.mxu0 0.0
        %709 = vmatpush1.msra.mxu0 0.0
        %710 = vmatprep.subr.mxu0 0.0
        %711 = vmatpush1.msra.mxu0 0.0
        %712 = vmatprep.subr.mxu0 0.0
        %713 = vmatpush1.msra.mxu0 0.0
        %714 = vmatprep.subr.mxu0 0.0
        %715 = vmatpush1.msra.mxu0 0.0
        %716 = vmatprep.subr.mxu0 0.0
        %717 = vmatpush1.msra.mxu0 0.0
        %718 = vmatprep.subr.mxu0 0.0
        %719 = vmatpush1.msra.mxu0 0.0
        %720 = vmatprep.subr.mxu0 0.0
        %721 = vmatpush1.msra.mxu0 0.0
        %722 = vmatprep.mubr.f32.mxu0 0.0
        %723 = vmatmul.mubr.f32.gmra.mrb[0].mxu0 %v569
        %v724 = vpop.f32.mrb[0].mxu0
        %v725 = vadd.f32 %v656, %v724
        %v726 = vpop.f32.mrb[0].mxu0
        %727 = vdwg.mxu0
        %v728 = vld [vmem:[%s5 + $0x3] sm:$0x1]
        %v729 = vlaneseq
        %v730 = vshrl.u32 %v729, 7
        %v731 = vsub.s32 0, %v730
        %v732 = vrot.slane %v728, %v731
        %v733 = vmul.f32 %v646, %v732
        %v734 = vrot.slane %v646, 7
        %v735 = vsel %vm552, 0.0, %v734
        %v736 = vld [vmem:[%s5 + $0x2] sm:$0x1]
        %v737 = vlaneseq
        %v738 = vshrl.u32 %v737, 7
        %v739 = vsub.s32 0, %v738
        %v740 = vrot.slane %v736, %v739
        %v741 = vmul.f32 %v735, %v740
        %v742 = vadd.f32 %v733, %v741
        %v743 = vrot.slane %v646, 6
        %v744 = vsel %vm553, 0.0, %v743
        %v745 = vld [vmem:[%s5 + $0x1] sm:$0x1]
        %v746 = vlaneseq
        %v747 = vshrl.u32 %v746, 7
        %v748 = vsub.s32 0, %v747
        %v749 = vrot.slane %v745, %v748
        %v750 = vmul.f32 %v744, %v749
        %v751 = vadd.f32 %v742, %v750
        %v752 = vrot.slane %v646, 5
        %v753 = vsel %vm554, 0.0, %v752
        %v754 = vld [vmem:[%s5] sm:$0x1]
        %v755 = vlaneseq
        %v756 = vshrl.u32 %v755, 7
        %v757 = vsub.s32 0, %v756
        %v758 = vrot.slane %v754, %v757
        %v759 = vmul.f32 %v753, %v758
        %v760 = vadd.f32 %v751, %v759
        %v761 = vld [vmem:[#allocation8] sm:$0x1]
        %v763 = vlaneseq
        %v764 = vshrl.u32 %v763, 7
        %v765 = vsub.s32 0, %v764
        %v766 = vrot.slane %v761, %v765
        %v768 = vadd.f32 %v760, %v766
        %v769 = vsub.f32 0.0, %v768
        %v770 = vmul.f32 %v769, 1.442695
        %v771 = vpow.pop %v770
        %v772 = vadd.f32 %v771, 1.0
        %v773 = vrcp.pop %v772
        %v774 = vmul.f32 %v768, %v773
        %v775 = vld [vmem:[%s7] sm:$0xff]
        %v776 = vld [vmem:[%s7 + $0x8] sm:$0xff]
        %v777 = vld [vmem:[%s7 + $0x10] sm:$0xff]
        %v778 = vld [vmem:[%s7 + $0x18] sm:$0xff]
        %v779 = vld [vmem:[%s7 + $0x20] sm:$0xff]
        %v780 = vld [vmem:[%s7 + $0x28] sm:$0xff]
        %v781 = vld [vmem:[%s7 + $0x30] sm:$0xff]
        %v782 = vld [vmem:[%s7 + $0x38] sm:$0xff]
        %v783 = vld [vmem:[#allocation10] sm:$0x1]
        %v785 = vlaneseq
        %v786 = vshrl.u32 %v785, 7
        %v787 = vsub.s32 0, %v786
        %v788 = vrot.slane %v783, %v787
        %vm790 = vcmask 523264
        %v792 = vsel %vm790, %v774, 0
        %794 = vmatprep.subr.mxu0 0.0
        %795 = vmatpush1.msra.mxu0 %v775
        %796 = vmatprep.subr.mxu0 0.0
        %797 = vmatpush1.msra.mxu0 %v776
        %798 = vmatprep.subr.mxu0 0.0
        %799 = vmatpush1.msra.mxu0 %v777
        %800 = vmatprep.subr.mxu0 0.0
        %801 = vmatpush1.msra.mxu0 %v778
        %802 = vmatprep.subr.mxu0 0.0
        %803 = vmatpush1.msra.mxu0 %v779
        %804 = vmatprep.subr.mxu0 0.0
        %805 = vmatpush1.msra.mxu0 %v780
        %806 = vmatprep.subr.mxu0 0.0
        %807 = vmatpush1.msra.mxu0 %v781
        %808 = vmatprep.subr.mxu0 0.0
        %809 = vmatpush1.msra.mxu0 %v782
        %810 = vmatprep.subr.mxu0 0.0
        %811 = vmatpush1.msra.mxu0 0.0
        %812 = vmatprep.subr.mxu0 0.0
        %813 = vmatpush1.msra.mxu0 0.0
        %814 = vmatprep.subr.mxu0 0.0
        %815 = vmatpush1.msra.mxu0 0.0
        %816 = vmatprep.subr.mxu0 0.0
        %817 = vmatpush1.msra.mxu0 0.0
        %818 = vmatprep.subr.mxu0 0.0
        %819 = vmatpush1.msra.mxu0 0.0
        %820 = vmatprep.subr.mxu0 0.0
        %821 = vmatpush1.msra.mxu0 0.0
        %822 = vmatprep.subr.mxu0 0.0
        %823 = vmatpush1.msra.mxu0 0.0
        %824 = vmatprep.subr.mxu0 0.0
        %825 = vmatpush1.msra.mxu0 0.0
        %826 = vmatprep.subr.mxu0 0.0
        %827 = vmatpush1.msra.mxu0 0.0
        %828 = vmatprep.subr.mxu0 0.0
        %829 = vmatpush1.msra.mxu0 0.0
        %830 = vmatprep.subr.mxu0 0.0
        %831 = vmatpush1.msra.mxu0 0.0
        %832 = vmatprep.subr.mxu0 0.0
        %833 = vmatpush1.msra.mxu0 0.0
        %834 = vmatprep.subr.mxu0 0.0
        %835 = vmatpush1.msra.mxu0 0.0
        %836 = vmatprep.subr.mxu0 0.0
        %837 = vmatpush1.msra.mxu0 0.0
        %838 = vmatprep.subr.mxu0 0.0
        %839 = vmatpush1.msra.mxu0 0.0
        %840 = vmatprep.subr.mxu0 0.0
        %841 = vmatpush1.msra.mxu0 0.0
        %842 = vmatprep.subr.mxu0 0.0
        %843 = vmatpush1.msra.mxu0 0.0
        %844 = vmatprep.subr.mxu0 0.0
        %845 = vmatpush1.msra.mxu0 0.0
        %846 = vmatprep.subr.mxu0 0.0
        %847 = vmatpush1.msra.mxu0 0.0
        %848 = vmatprep.subr.mxu0 0.0
        %849 = vmatpush1.msra.mxu0 0.0
        %850 = vmatprep.subr.mxu0 0.0
        %851 = vmatpush1.msra.mxu0 0.0
        %852 = vmatprep.subr.mxu0 0.0
        %853 = vmatpush1.msra.mxu0 0.0
        %854 = vmatprep.subr.mxu0 0.0
        %855 = vmatpush1.msra.mxu0 0.0
        %856 = vmatprep.subr.mxu0 0.0
        %857 = vmatpush1.msra.mxu0 0.0
        %858 = vmatprep.mubr.f32.mxu0 0.0
        %859 = vmatmul.mubr.f32.gmra.mrb[0].mxu0 %v792
        %v860 = vpop.f32.mrb[0].mxu0
        %v861 = vadd.f32 %v788, %v860
        %v862 = vpop.f32.mrb[0].mxu0
        %863 = vdwg.mxu0
        %v864 = vmul.f32 %v861, 1.442695
        %v865 = vpow.pop %v864
        %v866 = vadd.f32 %v865, 2.0
        %v867 = vrcp.pop %v866
        %v868 = vsub.f32 1.0, %v867
        %v869 = vsub.f32 1.0, %v868
        %v870 = vsel %vm552, 0.0, %v869
        %v871 = vmul.f32 %v868, %v774
        %v872 = vsel %vm552, %v774, %v871
        %v873 = vrot.slane %v870, 7
        %v874 = vsel %vm552, 1.0, %v873
        %v875 = vrot.slane %v872, 7
        %v876 = vsel %vm552, 0.0, %v875
        %v877 = vmul.f32 %v870, %v876
        %v878 = vadd.f32 %v877, %v872
        %v879 = vmul.f32 %v870, %v874
        %v880 = vrot.slane %v879, 6
        %v881 = vsel %vm553, 1.0, %v880
        %v882 = vrot.slane %v878, 6
        %v883 = vsel %vm553, 0.0, %v882
        %v884 = vmul.f32 %v879, %v883
        %v885 = vadd.f32 %v884, %v878
        %v886 = vmul.f32 %v879, %v881
        %v887 = vrot.slane %v885, 4
        %v888 = vsel %vm555, 0.0, %v887
        %v889 = vmul.f32 %v886, %v888
        %v890 = vadd.f32 %v889, %v885
        %v891 = vld [vmem:[#allocation11] sm:$0x1]
        %v893 = vlaneseq
        %v894 = vshrl.u32 %v893, 7
        %v895 = vsub.s32 0, %v894
        %v896 = vrot.slane %v891, %v895
        %v898 = vmul.f32 %v774, %v896
        %v899 = vadd.f32 %v890, %v898
        %v900 = vsub.f32 0.0, %v725
        %v901 = vmul.f32 %v900, 1.442695
        %v902 = vpow.pop %v901
        %v903 = vadd.f32 %v902, 1.0
        %v904 = vrcp.pop %v903
        %v905 = vmul.f32 %v725, %v904
        %v906 = vmul.f32 %v899, %v905
        %v907 = vld [vmem:[%s10] sm:$0xff]
        %v908 = vld [vmem:[%s10 + $0x8] sm:$0xff]
        %v909 = vld [vmem:[%s10 + $0x10] sm:$0xff]
        %v910 = vld [vmem:[%s10 + $0x18] sm:$0xff]
        %v911 = vld [vmem:[%s10 + $0x20] sm:$0xff]
        %v912 = vld [vmem:[%s10 + $0x28] sm:$0xff]
        %v913 = vld [vmem:[%s10 + $0x30] sm:$0xff]
        %v914 = vld [vmem:[%s10 + $0x38] sm:$0xff]
        %v915 = vld [vmem:[%s11] sm:$0x1]
        %v917 = vlaneseq
        %v918 = vshrl.u32 %v917, 7
        %v919 = vsub.s32 0, %v918
        %v920 = vrot.slane %v915, %v919
        %v923 = vsel %vm790, %v906, 0
        %925 = vmatprep.subr.mxu0 0.0
        %926 = vmatpush1.msra.mxu0 %v907
        %927 = vmatprep.subr.mxu0 0.0
        %928 = vmatpush1.msra.mxu0 %v908
        %929 = vmatprep.subr.mxu0 0.0
        %930 = vmatpush1.msra.mxu0 %v909
        %931 = vmatprep.subr.mxu0 0.0
        %932 = vmatpush1.msra.mxu0 %v910
        %933 = vmatprep.subr.mxu0 0.0
        %934 = vmatpush1.msra.mxu0 %v911
        %935 = vmatprep.subr.mxu0 0.0
        %936 = vmatpush1.msra.mxu0 %v912
        %937 = vmatprep.subr.mxu0 0.0
        %938 = vmatpush1.msra.mxu0 %v913
        %939 = vmatprep.subr.mxu0 0.0
        %940 = vmatpush1.msra.mxu0 %v914
        %941 = vmatprep.subr.mxu0 0.0
        %942 = vmatpush1.msra.mxu0 0.0
        %943 = vmatprep.subr.mxu0 0.0
        %944 = vmatpush1.msra.mxu0 0.0
        %945 = vmatprep.subr.mxu0 0.0
        %946 = vmatpush1.msra.mxu0 0.0
        %947 = vmatprep.subr.mxu0 0.0
        %948 = vmatpush1.msra.mxu0 0.0
        %949 = vmatprep.subr.mxu0 0.0
        %950 = vmatpush1.msra.mxu0 0.0
        %951 = vmatprep.subr.mxu0 0.0
        %952 = vmatpush1.msra.mxu0 0.0
        %953 = vmatprep.subr.mxu0 0.0
        %954 = vmatpush1.msra.mxu0 0.0
        %955 = vmatprep.subr.mxu0 0.0
        %956 = vmatpush1.msra.mxu0 0.0
        %957 = vmatprep.subr.mxu0 0.0
        %958 = vmatpush1.msra.mxu0 0.0
        %959 = vmatprep.subr.mxu0 0.0
        %960 = vmatpush1.msra.mxu0 0.0
        %961 = vmatprep.subr.mxu0 0.0
        %962 = vmatpush1.msra.mxu0 0.0
        %963 = vmatprep.subr.mxu0 0.0
        %964 = vmatpush1.msra.mxu0 0.0
        %965 = vmatprep.subr.mxu0 0.0
        %966 = vmatpush1.msra.mxu0 0.0
        %967 = vmatprep.subr.mxu0 0.0
        %968 = vmatpush1.msra.mxu0 0.0
        %969 = vmatprep.subr.mxu0 0.0
        %970 = vmatpush1.msra.mxu0 0.0
        %971 = vmatprep.subr.mxu0 0.0
        %972 = vmatpush1.msra.mxu0 0.0
        %973 = vmatprep.subr.mxu0 0.0
        %974 = vmatpush1.msra.mxu0 0.0
        %975 = vmatprep.subr.mxu0 0.0
        %976 = vmatpush1.msra.mxu0 0.0
        %977 = vmatprep.subr.mxu0 0.0
        %978 = vmatpush1.msra.mxu0 0.0
        %979 = vmatprep.subr.mxu0 0.0
        %980 = vmatpush1.msra.mxu0 0.0
        %981 = vmatprep.subr.mxu0 0.0
        %982 = vmatpush1.msra.mxu0 0.0
        %983 = vmatprep.subr.mxu0 0.0
        %984 = vmatpush1.msra.mxu0 0.0
        %985 = vmatprep.subr.mxu0 0.0
        %986 = vmatpush1.msra.mxu0 0.0
        %987 = vmatprep.subr.mxu0 0.0
        %988 = vmatpush1.msra.mxu0 0.0
        %989 = vmatprep.mubr.f32.mxu0 0.0
        %990 = vmatmul.mubr.f32.gmra.mrb[0].mxu0 %v923
        %v991 = vpop.f32.mrb[0].mxu0
        %v992 = vadd.f32 %v920, %v991
        %v993 = vpop.f32.mrb[0].mxu0
        %994 = vdwg.mxu0
        %v995 = vadd.f32 %v992, %v548
        %v996 = vsel %vm567, %v995, 0.0
        %997 = vadd.xlane.f32.xlu0 %v996
        %v998 = vpop.xlane.xlu0 %997
        %v999 = vrcp.pop 32.0
        %v1000 = vmul.f32 %v998, %v999
        %v1001 = vsub.f32 %v995, %v1000
        %v1002 = vmul.f32 %v1001, %v1001
        %v1003 = vsel %vm567, %v1002, 0.0
        %1004 = vadd.xlane.f32.xlu0 %v1003
        %v1005 = vpop.xlane.xlu0 %1004
        %v1006 = vmul.f32 %v1005, %v999
        %v1007 = vadd.f32 %v1006, 1e-05
        %v1008 = vrsqrt.pop %v1007
        %v1009 = vmul.f32 %v1001, %v1008
        %v1010 = vld [vmem:[%s12] sm:$0x1]
        %v1012 = vlaneseq
        %v1013 = vshrl.u32 %v1012, 7
        %v1014 = vsub.s32 0, %v1013
        %v1015 = vrot.slane %v1010, %v1014
        %v1017 = vmul.f32 %v1009, %v1015
        %v1018 = vld [vmem:[%s13] sm:$0x1]
        %v1020 = vlaneseq
        %v1021 = vshrl.u32 %v1020, 7
        %v1022 = vsub.s32 0, %v1021
        %v1023 = vrot.slane %v1018, %v1022
        %v1025 = vadd.f32 %v1017, %v1023
        %1026 = vst.msk [vmem:[%s547] sm:$0xff] %vm567, %v1025
        %s1027 = sand.u32 %s341, 1
        %s1028 = scalar_lea.sflag [#allocation4], %s1027
        %s1029 = sand.u32 %s341, 1
        %s1030 = smul.addr %s1029, 8
        %s1031 = scalar_lea.vmem [#allocation13], %s1030
        // Predicated region
        $region101: #{tpu_custom_call.1} parent=75 // pred_check
          %p1032 = pneg %p351
        $region102: #{tpu_custom_call.1} parent=75 // pred_check_branch
          %1034 = sbr.rel (%p1032) target = $region104
        $region103: #{tpu_custom_call.1} parent=75 // pred_region
          %s1036 = ssub.s32 128, 128
          %1037 = vsyncadd %s1028, %s1036
          %s1038 = smul.addr %s34, 128
          %s1039 = scalar_lea.hbm %s14, %s1038
          %s1041 = sshll.u32 %s1031, 4
          %s1042 = int_to_ptr.vmem [resolvable:$true] %s1041
          %1044 = dma.vmem_to_hbm [thread:$0]  %s1042, 128, %s1039, %s1028
        $region104: #{tpu_custom_call.1} parent=75 // pred_fallthru
          _
      $region76: #{tpu_custom_call.1} parent=5 // pred_fallthru
        _
      %p1045 = scmp.le.s32.totalorder 2, %s29
      // Predicated region
      $region105: #{tpu_custom_call.1} parent=5 // pred_check
        %p1046 = pneg %p1045
      $region106: #{tpu_custom_call.1} parent=5 // pred_check_branch
        %1048 = sbr.rel (%p1046) target = $region108
      $region107: #{tpu_custom_call.1} parent=5 // pred_region
        %s1049 = ssub.s32 %s29, 2
        // Predicated region
        $region109: #{tpu_custom_call.1} parent=107 // pred_check
          %p1050 = pneg %p357
        $region110: #{tpu_custom_call.1} parent=107 // pred_check_branch
          %1052 = sbr.rel (%p1050) target = $region112
        $region111: #{tpu_custom_call.1} parent=107 // pred_region
          %s1053 = sand.u32 %s342, 1
          %s1054 = scalar_lea.sflag [#allocation4], %s1053
          %s1055 = sand.u32 %s342, 1
          %s1056 = smul.addr %s1055, 8
          %s1057 = scalar_lea.vmem [#allocation13], %s1056
          %1058 = dma.done %s1054, 128
        $region112: #{tpu_custom_call.1} parent=107 // pred_fallthru
          _
      $region108: #{tpu_custom_call.1} parent=5 // pred_fallthru
        _
    $region6: #{tpu_custom_call.1} parent=1 // loop_footer
      %s33 = sadd.s32 1, %s29
    $region7: #{tpu_custom_call.1} parent=1 // loop_footer_branch
      %28 = sbr.rel target = $region3
    $region8: #{tpu_custom_call.1} parent=1 // loop_exit
      _
    %1059 = vsyncpa [#allocation3], 1
    %s1060 = scalar_lea.sflag [#allocation3], 1
    %1061 = vsyncpa %s1060, 1
    %1062 = vsyncpa [#allocation6], 1
    %1063 = vsyncpa [#allocation9], 1
    %1064 = vsyncpa [#allocation12], 1
    %1065 = vsyncpa [#allocation4], 1
    %s1066 = scalar_lea.sflag [#allocation4], 1
    %1067 = vsyncpa %s1066, 1

</llo_original>
